<compile_context>
chip_gen: v7x
topology: tpu7x:2x2x1
jax: 0.10.0
libtpu: 0.0.40
codegen_flags: <defaults>
</compile_context>

<pallas_src>
import functools

import jax
import jax.numpy as jnp
from jax.experimental import pallas as pl
from jax.experimental.pallas import tpu as pltpu

EPS = 1e-5  # torch.nn.LayerNorm default eps


def _elu(h):
    # torch.nn.ELU(alpha=1.0); min() keeps the discarded branch finite.
    return jnp.where(h > 0, h, jnp.exp(jnp.minimum(h, 0.0)) - 1.0)


def _layernorm(h, g=None, b=None, n=None):
    # Single-pass LN (f32): mean and mean-of-squares are independent lane reductions.
    if n is None:
        n = h.shape[-1]
    inv_n = 1.0 / float(n)
    mu = jnp.sum(h, axis=-1, keepdims=True) * inv_n
    ms = jnp.sum(h * h, axis=-1, keepdims=True) * inv_n
    var = jnp.maximum(ms - mu * mu, 0.0)
    out = (h - mu) * jax.lax.rsqrt(var + EPS)
    if g is not None:
        out = out * g + b
    return out


def _dot(a, w):
    # bf16 MXU operands, f32 accumulation.
    return jnp.dot(a, w, preferred_element_type=jnp.float32)


def dsd_pro_kernel(x_ref, wxw_ref, wbig_ref, bias_ref, out_ref, *, batch, Ns, H, R):
    """x_ref: (M,F) bf16   wxw_ref: (F,4R) bf16   wbig_ref: (8,R,R) bf16   bias_ref: (11,R) f32.

    wbig layout : 0=g1*W1b, 1=W2p, 2=g2*W2b, 3=W3p, 4=g3*W3b, 5=W4p, 6=g4*W4b,
                  7=Wf1 (zero-padded to R cols).
    bias layout : 0=b1a 1=b1b' 2=b2a 3=b2b' 4=b3a 5=b3b' 6=b4a 7=b4b'
                  8=bf1(pad) 9=(gf*wf2)^T(pad) 10=bf2' (lane 0).   (b' = be@W + b, LN folded)
    """
    x2 = x_ref[...]                     # (M, F) bf16
    B = bias_ref[...]                   # (11, R) f32

    def row(k):
        return B[k:k + 1, :]            # (1, R), broadcasts over M rows

    # One wide MXU pass covers all four x-branches (independent of the serial blk chain).
    xw = _dot(x2, wxw_ref[...])         # (M, 4R) f32
    xws = [xw[:, i * R:(i + 1) * R] for i in range(4)]

    def block(prev, xw_i, wp_idx, wo_idx, b_pre, b_post):
        h = xw_i
        if prev is not None:            # cat([xf_i, prev]) @ W folded into xw_i + prev@Wp
            h = h + _dot(prev.astype(jnp.bfloat16), wbig_ref[wp_idx])
        h = _elu(h + row(b_pre))
        hn = _layernorm(h)              # affine (gamma/beta) folded into the next Linear
        return _dot(hn.astype(jnp.bfloat16), wbig_ref[wo_idx]) + row(b_post)

    blk1 = block(None, xws[0], None, 0, 0, 1)
    blk2 = block(blk1, xws[1], 1, 2, 2, 3) + blk1
    blk3 = block(blk2, xws[2], 3, 4, 4, 5) + blk2
    blk4 = block(blk3, xws[3], 5, 6, 6, 7) + blk3

    # fc head: Linear(R,H) -> ReLU -> LN(H) -> Linear(H,1).  Pad lanes H..R-1 of h are
    # exactly 0 (zero-padded Wf1/bf1 + ReLU), so the lane sums divided by H are correct.
    h = _dot(blk4.astype(jnp.bfloat16), wbig_ref[7]) + row(8)     # (M, R)
    h = jnp.maximum(h, 0.0)
    hn = _layernorm(h, n=H)             # pad lanes of hn are nonzero but killed by row(9)

    # mean over Ns, reassociated: mean_Ns(hn @ wf2' + bf2') == (avg @ hn) . wf2' + bf2'.
    # (batch, M) block-diagonal averaging mask built in-kernel (no extra DMA).
    M = x2.shape[0]
    rb = jax.lax.broadcasted_iota(jnp.int32, (batch, M), 0)
    cm = jax.lax.broadcasted_iota(jnp.int32, (batch, M), 1)
    d = cm - rb * Ns
    avg = jnp.where((d >= 0) & (d < Ns), 1.0 / Ns, 0.0).astype(jnp.float32)

    avgh = jnp.dot(avg, hn, preferred_element_type=jnp.float32)   # (batch, R)
    out = jnp.sum(avgh * row(9), axis=-1, keepdims=True)          # wf2' (gamma-folded)
    out_ref[...] = out + B[10:11, 0:1]                            # + bf2'


def init_params(key, blk_list, hidden_size=32):
    """Deterministic synthetic parameters with torch.nn.Linear-style uniform init."""
    R = hidden_size * 4          # reduce_size
    H = hidden_size
    keys = iter(jax.random.split(key, 64))

    def lin(fan_in, fan_out):
        s = 1.0 / float(fan_in) ** 0.5
        w = jax.random.uniform(next(keys), (fan_in, fan_out), jnp.float32, -s, s)
        b = jax.random.uniform(next(keys), (1, fan_out), jnp.float32, -s, s)
        return w, b

    params = []
    # blk1: Linear(blk0, R) -> ELU -> LN(R) -> Linear(R, R)
    w1a, b1a = lin(blk_list[0], R)
    w1b, b1b = lin(R, R)
    params += [w1a, b1a, jnp.ones((1, R), jnp.float32), jnp.zeros((1, R), jnp.float32),
               w1b, b1b]
    # blk2..blk4: Linear(blk_i + R, R) split into [W_x ; W_prev]
    for i in range(1, 4):
        wfull, b1 = lin(blk_list[i] + R, R)
        wx, wp = wfull[:blk_list[i]], wfull[blk_list[i]:]
        w2, b2 = lin(R, R)
        params += [wx, wp, b1, jnp.ones((1, R), jnp.float32),
                   jnp.zeros((1, R), jnp.float32), w2, b2]
    # fc: Linear(R, H) -> ReLU -> LN(H) -> Linear(H, 1)
    wf1, bf1 = lin(R, H)
    wf2, bf2 = lin(H, 1)
    params += [wf1, bf1, jnp.ones((1, H), jnp.float32), jnp.zeros((1, H), jnp.float32),
               wf2, bf2]
    return params


def pack_params(params, blk_list):
    """Pack the 33 logical parameters into 3 lane-aligned operands (host-side, one time)."""
    (w1a, b1a, g1, be1, w1b, b1b,
     w2x, w2p, b2a, g2, be2, w2b, b2b,
     w3x, w3p, b3a, g3, be3, w3b, b3b,
     w4x, w4p, b4a, g4, be4, w4b, b4b,
     wf1, bf1, gf, bef, wf2, bf2) = params
    F = sum(blk_list)
    R = w1a.shape[1]
    H = wf1.shape[1]
    seg_starts = [0]
    for blen in blk_list[:-1]:
        seg_starts.append(seg_starts[-1] + blen)

    # Wide x-branch weight (F, 4R): W_x_i at rows seg_i..seg_i+blk_i, lanes i*R..(i+1)*R.
    wxw = jnp.zeros((F, 4 * R), jnp.float32)
    for i, w in enumerate([w1a, w2x, w3x, w4x]):
        s = seg_starts[i]
        wxw = wxw.at[s:s + w.shape[0], i * R:(i + 1) * R].set(w)

    def fold(g, w):              # diag(g) @ W : scale row j of W by gamma[j]
        return g.reshape(-1, 1) * w

    # fc Linear1 zero-padded to (R, R).  The in-kernel LN with divisor H relies on the
    # fc pre-activation's pad lanes H..R-1 being exactly zero (zero cols + zero bf1 + ReLU).
    wf1_pad = jnp.zeros((R, R), jnp.float32).at[:, :H].set(wf1)
    w_big = jnp.stack([fold(g1, w1b), w2p, fold(g2, w2b), w3p, fold(g3, w3b),
                       w4p, fold(g4, w4b), wf1_pad])              # (8, R, R)

    def pad_row(v):              # (1, k) -> (1, R), zero elsewhere
        return jnp.zeros((1, R), jnp.float32).at[:, :v.shape[1]].set(v)

    # LN affines folded into the following Linear's bias: b' = be @ W + b.
    rows = [b1a, be1 @ w1b + b1b,
            b2a, be2 @ w2b + b2b,
            b3a, be3 @ w3b + b3b,
            b4a, be4 @ w4b + b4b,
            pad_row(bf1),
            pad_row(gf * wf2.T),            # gamma-folded wf2 as a lane row
            pad_row(bef @ wf2 + bf2)]       # bf2' scalar in lane 0
    bias_pack = jnp.concatenate(rows, axis=0)                     # (11, R) f32

    wxw_bf16 = wxw.astype(jnp.bfloat16)
    w_big_bf16 = w_big.astype(jnp.bfloat16)
    # Pad lanes must stay exactly zero after the bf16 cast (they do: 0.0 is exact in bf16).
    assert bool(jnp.all(w_big_bf16[7, :, H:] == 0))
    assert bool(jnp.all(bias_pack[8:, H:] == 0))
    return wxw_bf16, w_big_bf16, bias_pack


def dsd_pro_forward(x, packed, *, hidden_size):
    batch, Ns, F = x.shape
    M = batch * Ns
    R = hidden_size * 4
    x2 = x.reshape(M, F).astype(jnp.bfloat16)   # bf16 MXU operand; accumulation stays f32
    wxw, w_big, bias_pack = packed

    kernel = functools.partial(dsd_pro_kernel, batch=batch, Ns=Ns, H=hidden_size, R=R)
    vmem = pl.BlockSpec(memory_space=pltpu.MemorySpace.VMEM)
    return pl.pallas_call(
        kernel,
        out_shape=jax.ShapeDtypeStruct((batch, 1), jnp.float32),
        in_specs=[vmem] * 4,
        out_specs=vmem,
    )(x2, wxw, w_big, bias_pack)


def dsd_pro_reference(x, params, blk_list):
    """Pure-JAX f32 mirror of the torch forward (uses concatenation like the original)."""
    (w1a, b1a, g1, be1, w1b, b1b,
     w2x, w2p, b2a, g2, be2, w2b, b2b,
     w3x, w3p, b3a, g3, be3, w3b, b3b,
     w4x, w4p, b4a, g4, be4, w4b, b4b,
     wf1, bf1, gf, bef, wf2, bf2) = params
    batch, Ns, F = x.shape
    x2 = x.reshape(batch * Ns, F).astype(jnp.float32)
    seg = [blk_list[0]]
    for i in range(1, 4):
        seg.append(seg[i - 1] + blk_list[i])
    xf1, xf2 = x2[:, : seg[0]], x2[:, seg[0]: seg[1]]
    xf3, xf4 = x2[:, seg[1]: seg[2]], x2[:, seg[2]:]

    def emb(inp, w1, b1, g, be, w2, b2):
        h = inp @ w1 + b1
        h = _layernorm(_elu(h), g=g, b=be)
        return h @ w2 + b2

    blk1 = emb(xf1, w1a, b1a, g1, be1, w1b, b1b)
    blk2 = emb(jnp.concatenate([xf2, blk1], 1), jnp.concatenate([w2x, w2p], 0),
               b2a, g2, be2, w2b, b2b) + blk1
    blk3 = emb(jnp.concatenate([xf3, blk2], 1), jnp.concatenate([w3x, w3p], 0),
               b3a, g3, be3, w3b, b3b) + blk2
    blk4 = emb(jnp.concatenate([xf4, blk3], 1), jnp.concatenate([w4x, w4p], 0),
               b4a, g4, be4, w4b, b4b) + blk3
    h = blk4 @ wf1 + bf1
    h = _layernorm(jnp.maximum(h, 0.0), g=gf, b=bef)
    score = h @ wf2 + bf2
    return jnp.mean(score.reshape(batch, Ns), axis=1, keepdims=True)


if __name__ == "__main__":
    blk_list = [16, 16, 16, 16]   # per-block feature sizes; total F = 64
    hidden_size = 32              # reduce_size = 128
    batch, Ns = 2, 8

    key = jax.random.PRNGKey(0)
    kx, kp = jax.random.split(key)
    x = jax.random.normal(kx, (batch, Ns, sum(blk_list)), jnp.float32)
    params = init_params(kp, blk_list, hidden_size=hidden_size)
    packed = pack_params(params, blk_list)

    fwd = jax.jit(functools.partial(dsd_pro_forward, hidden_size=hidden_size))
    out = jax.block_until_ready(fwd(x, packed))

    ref = dsd_pro_reference(x, params, blk_list)
    assert out.shape == (batch, 1), out.shape
    assert bool(jnp.all(jnp.isfinite(out)))
    # bf16 matmul operands (f32 accumulation) vs. f32 reference -> slightly looser tolerance.
    assert bool(jnp.allclose(out, ref, atol=2e-2, rtol=2e-2)), (out, ref)
    print("KERNEL_OK")
</pallas_src>

<mosaic_0001>
module attributes {stable_mosaic.version = 11 : i64} {
  func.func @dsd_pro_kernel(%arg0: memref<16x64xbf16, #tpu.memory_space<vmem>>, %arg1: memref<64x512xbf16, #tpu.memory_space<vmem>>, %arg2: memref<8x128x128xbf16, #tpu.memory_space<vmem>>, %arg3: memref<11x128xf32, #tpu.memory_space<vmem>>, %arg4: memref<2x1xf32, #tpu.memory_space<vmem>>) attributes {dimension_semantics = [], scalar_prefetch = 0 : i64, scratch_operands = 0 : i64, tpu.core_type = #tpu.core_type<tc>} {
    %c0 = arith.constant 0 : index
    %c0_0 = arith.constant 0 : index
    %0 = vector.load %arg0[%c0, %c0_0] : memref<16x64xbf16, #tpu.memory_space<vmem>>, vector<16x64xbf16>
    %c0_1 = arith.constant 0 : index
    %c0_2 = arith.constant 0 : index
    %1 = vector.load %arg3[%c0_1, %c0_2] : memref<11x128xf32, #tpu.memory_space<vmem>>, vector<11x128xf32>
    %c0_3 = arith.constant 0 : index
    %c0_4 = arith.constant 0 : index
    %2 = vector.load %arg1[%c0_3, %c0_4] : memref<64x512xbf16, #tpu.memory_space<vmem>>, vector<64x512xbf16>
    %cst = arith.constant dense<0.000000e+00> : vector<16x512xf32>
    %3 = tpu.matmul %0, %2, %cst {dimension_numbers = #tpu.dot_dimension_numbers<[1], [0], [0], [1], [0, 0, 1, 1], [], []>} : vector<16x64xbf16>, vector<64x512xbf16>, vector<16x512xf32> -> vector<16x512xf32>
    %4 = vector.extract_strided_slice %3 {offsets = [0, 0], sizes = [16, 128], strides = [1, 1]} : vector<16x512xf32> to vector<16x128xf32>
    %5 = vector.extract_strided_slice %3 {offsets = [0, 128], sizes = [16, 128], strides = [1, 1]} : vector<16x512xf32> to vector<16x128xf32>
    %6 = vector.extract_strided_slice %3 {offsets = [0, 256], sizes = [16, 128], strides = [1, 1]} : vector<16x512xf32> to vector<16x128xf32>
    %7 = vector.extract_strided_slice %3 {offsets = [0, 384], sizes = [16, 128], strides = [1, 1]} : vector<16x512xf32> to vector<16x128xf32>
    %8 = vector.extract_strided_slice %1 {offsets = [0, 0], sizes = [1, 128], strides = [1, 1]} : vector<11x128xf32> to vector<1x128xf32>
    %9 = vector.broadcast %8 : vector<1x128xf32> to vector<16x128xf32>
    %10 = arith.addf %4, %9 : vector<16x128xf32>
    %cst_5 = arith.constant 0.000000e+00 : f32
    %11 = vector.broadcast %cst_5 : f32 to vector<16x128xf32>
    %12 = arith.cmpf ogt, %10, %11 : vector<16x128xf32>
    %cst_6 = arith.constant 0.000000e+00 : f32
    %13 = vector.broadcast %cst_6 : f32 to vector<16x128xf32>
    %14 = arith.minimumf %10, %13 : vector<16x128xf32>
    %15 = math.exp %14 : vector<16x128xf32>
    %cst_7 = arith.constant 1.000000e+00 : f32
    %16 = vector.broadcast %cst_7 : f32 to vector<16x128xf32>
    %17 = arith.subf %15, %16 : vector<16x128xf32>
    %18 = arith.select %12, %10, %17 : vector<16x128xi1>, vector<16x128xf32>
    %cst_8 = arith.constant dense<0.000000e+00> : vector<16xf32>
    %19 = vector.multi_reduction <add>, %18, %cst_8 [1] : vector<16x128xf32> to vector<16xf32>
    %20 = vector.shape_cast %19 : vector<16xf32> to vector<16x1xf32>
    %cst_9 = arith.constant 7.812500e-03 : f32
    %21 = vector.broadcast %cst_9 : f32 to vector<16x1xf32>
    %22 = arith.mulf %20, %21 : vector<16x1xf32>
    %23 = arith.mulf %18, %18 : vector<16x128xf32>
    %cst_10 = arith.constant dense<0.000000e+00> : vector<16xf32>
    %24 = vector.multi_reduction <add>, %23, %cst_10 [1] : vector<16x128xf32> to vector<16xf32>
    %25 = vector.shape_cast %24 : vector<16xf32> to vector<16x1xf32>
    %cst_11 = arith.constant 7.812500e-03 : f32
    %26 = vector.broadcast %cst_11 : f32 to vector<16x1xf32>
    %27 = arith.mulf %25, %26 : vector<16x1xf32>
    %28 = arith.mulf %22, %22 : vector<16x1xf32>
    %29 = arith.subf %27, %28 : vector<16x1xf32>
    %cst_12 = arith.constant 0.000000e+00 : f32
    %30 = vector.broadcast %cst_12 : f32 to vector<16x1xf32>
    %31 = arith.maximumf %29, %30 : vector<16x1xf32>
    %32 = vector.broadcast %22 : vector<16x1xf32> to vector<16x128xf32>
    %33 = arith.subf %18, %32 : vector<16x128xf32>
    %cst_13 = arith.constant 9.99999974E-6 : f32
    %34 = vector.broadcast %cst_13 : f32 to vector<16x1xf32>
    %35 = arith.addf %31, %34 : vector<16x1xf32>
    %36 = math.rsqrt %35 : vector<16x1xf32>
    %37 = vector.broadcast %36 : vector<16x1xf32> to vector<16x128xf32>
    %38 = arith.mulf %33, %37 : vector<16x128xf32>
    %39 = arith.truncf %38 : vector<16x128xf32> to vector<16x128xbf16>
    %c0_14 = arith.constant 0 : index
    %c0_15 = arith.constant 0 : index
    %c0_16 = arith.constant 0 : index
    %40 = vector.load %arg2[%c0_14, %c0_15, %c0_16] : memref<8x128x128xbf16, #tpu.memory_space<vmem>>, vector<1x128x128xbf16>
    %41 = vector.shape_cast %40 : vector<1x128x128xbf16> to vector<128x128xbf16>
    %cst_17 = arith.constant dense<0.000000e+00> : vector<16x128xf32>
    %42 = tpu.matmul %39, %41, %cst_17 {dimension_numbers = #tpu.dot_dimension_numbers<[1], [0], [0], [1], [0, 0, 1, 1], [], []>} : vector<16x128xbf16>, vector<128x128xbf16>, vector<16x128xf32> -> vector<16x128xf32>
    %43 = vector.extract_strided_slice %1 {offsets = [1, 0], sizes = [1, 128], strides = [1, 1]} : vector<11x128xf32> to vector<1x128xf32>
    %44 = vector.broadcast %43 : vector<1x128xf32> to vector<16x128xf32>
    %45 = arith.addf %42, %44 : vector<16x128xf32>
    %46 = arith.truncf %45 : vector<16x128xf32> to vector<16x128xbf16>
    %c1 = arith.constant 1 : index
    %c0_18 = arith.constant 0 : index
    %c0_19 = arith.constant 0 : index
    %47 = vector.load %arg2[%c1, %c0_18, %c0_19] : memref<8x128x128xbf16, #tpu.memory_space<vmem>>, vector<1x128x128xbf16>
    %48 = vector.shape_cast %47 : vector<1x128x128xbf16> to vector<128x128xbf16>
    %cst_20 = arith.constant dense<0.000000e+00> : vector<16x128xf32>
    %49 = tpu.matmul %46, %48, %cst_20 {dimension_numbers = #tpu.dot_dimension_numbers<[1], [0], [0], [1], [0, 0, 1, 1], [], []>} : vector<16x128xbf16>, vector<128x128xbf16>, vector<16x128xf32> -> vector<16x128xf32>
    %50 = arith.addf %5, %49 : vector<16x128xf32>
    %51 = vector.extract_strided_slice %1 {offsets = [2, 0], sizes = [1, 128], strides = [1, 1]} : vector<11x128xf32> to vector<1x128xf32>
    %52 = vector.broadcast %51 : vector<1x128xf32> to vector<16x128xf32>
    %53 = arith.addf %50, %52 : vector<16x128xf32>
    %cst_21 = arith.constant 0.000000e+00 : f32
    %54 = vector.broadcast %cst_21 : f32 to vector<16x128xf32>
    %55 = arith.cmpf ogt, %53, %54 : vector<16x128xf32>
    %cst_22 = arith.constant 0.000000e+00 : f32
    %56 = vector.broadcast %cst_22 : f32 to vector<16x128xf32>
    %57 = arith.minimumf %53, %56 : vector<16x128xf32>
    %58 = math.exp %57 : vector<16x128xf32>
    %cst_23 = arith.constant 1.000000e+00 : f32
    %59 = vector.broadcast %cst_23 : f32 to vector<16x128xf32>
    %60 = arith.subf %58, %59 : vector<16x128xf32>
    %61 = arith.select %55, %53, %60 : vector<16x128xi1>, vector<16x128xf32>
    %cst_24 = arith.constant dense<0.000000e+00> : vector<16xf32>
    %62 = vector.multi_reduction <add>, %61, %cst_24 [1] : vector<16x128xf32> to vector<16xf32>
    %63 = vector.shape_cast %62 : vector<16xf32> to vector<16x1xf32>
    %cst_25 = arith.constant 7.812500e-03 : f32
    %64 = vector.broadcast %cst_25 : f32 to vector<16x1xf32>
    %65 = arith.mulf %63, %64 : vector<16x1xf32>
    %66 = arith.mulf %61, %61 : vector<16x128xf32>
    %cst_26 = arith.constant dense<0.000000e+00> : vector<16xf32>
    %67 = vector.multi_reduction <add>, %66, %cst_26 [1] : vector<16x128xf32> to vector<16xf32>
    %68 = vector.shape_cast %67 : vector<16xf32> to vector<16x1xf32>
    %cst_27 = arith.constant 7.812500e-03 : f32
    %69 = vector.broadcast %cst_27 : f32 to vector<16x1xf32>
    %70 = arith.mulf %68, %69 : vector<16x1xf32>
    %71 = arith.mulf %65, %65 : vector<16x1xf32>
    %72 = arith.subf %70, %71 : vector<16x1xf32>
    %cst_28 = arith.constant 0.000000e+00 : f32
    %73 = vector.broadcast %cst_28 : f32 to vector<16x1xf32>
    %74 = arith.maximumf %72, %73 : vector<16x1xf32>
    %75 = vector.broadcast %65 : vector<16x1xf32> to vector<16x128xf32>
    %76 = arith.subf %61, %75 : vector<16x128xf32>
    %cst_29 = arith.constant 9.99999974E-6 : f32
    %77 = vector.broadcast %cst_29 : f32 to vector<16x1xf32>
    %78 = arith.addf %74, %77 : vector<16x1xf32>
    %79 = math.rsqrt %78 : vector<16x1xf32>
    %80 = vector.broadcast %79 : vector<16x1xf32> to vector<16x128xf32>
    %81 = arith.mulf %76, %80 : vector<16x128xf32>
    %82 = arith.truncf %81 : vector<16x128xf32> to vector<16x128xbf16>
    %c2 = arith.constant 2 : index
    %c0_30 = arith.constant 0 : index
    %c0_31 = arith.constant 0 : index
    %83 = vector.load %arg2[%c2, %c0_30, %c0_31] : memref<8x128x128xbf16, #tpu.memory_space<vmem>>, vector<1x128x128xbf16>
    %84 = vector.shape_cast %83 : vector<1x128x128xbf16> to vector<128x128xbf16>
    %cst_32 = arith.constant dense<0.000000e+00> : vector<16x128xf32>
    %85 = tpu.matmul %82, %84, %cst_32 {dimension_numbers = #tpu.dot_dimension_numbers<[1], [0], [0], [1], [0, 0, 1, 1], [], []>} : vector<16x128xbf16>, vector<128x128xbf16>, vector<16x128xf32> -> vector<16x128xf32>
    %86 = vector.extract_strided_slice %1 {offsets = [3, 0], sizes = [1, 128], strides = [1, 1]} : vector<11x128xf32> to vector<1x128xf32>
    %87 = vector.broadcast %86 : vector<1x128xf32> to vector<16x128xf32>
    %88 = arith.addf %85, %87 : vector<16x128xf32>
    %89 = arith.addf %88, %45 : vector<16x128xf32>
    %90 = arith.truncf %89 : vector<16x128xf32> to vector<16x128xbf16>
    %c3 = arith.constant 3 : index
    %c0_33 = arith.constant 0 : index
    %c0_34 = arith.constant 0 : index
    %91 = vector.load %arg2[%c3, %c0_33, %c0_34] : memref<8x128x128xbf16, #tpu.memory_space<vmem>>, vector<1x128x128xbf16>
    %92 = vector.shape_cast %91 : vector<1x128x128xbf16> to vector<128x128xbf16>
    %cst_35 = arith.constant dense<0.000000e+00> : vector<16x128xf32>
    %93 = tpu.matmul %90, %92, %cst_35 {dimension_numbers = #tpu.dot_dimension_numbers<[1], [0], [0], [1], [0, 0, 1, 1], [], []>} : vector<16x128xbf16>, vector<128x128xbf16>, vector<16x128xf32> -> vector<16x128xf32>
    %94 = arith.addf %6, %93 : vector<16x128xf32>
    %95 = vector.extract_strided_slice %1 {offsets = [4, 0], sizes = [1, 128], strides = [1, 1]} : vector<11x128xf32> to vector<1x128xf32>
    %96 = vector.broadcast %95 : vector<1x128xf32> to vector<16x128xf32>
    %97 = arith.addf %94, %96 : vector<16x128xf32>
    %cst_36 = arith.constant 0.000000e+00 : f32
    %98 = vector.broadcast %cst_36 : f32 to vector<16x128xf32>
    %99 = arith.cmpf ogt, %97, %98 : vector<16x128xf32>
    %cst_37 = arith.constant 0.000000e+00 : f32
    %100 = vector.broadcast %cst_37 : f32 to vector<16x128xf32>
    %101 = arith.minimumf %97, %100 : vector<16x128xf32>
    %102 = math.exp %101 : vector<16x128xf32>
    %cst_38 = arith.constant 1.000000e+00 : f32
    %103 = vector.broadcast %cst_38 : f32 to vector<16x128xf32>
    %104 = arith.subf %102, %103 : vector<16x128xf32>
    %105 = arith.select %99, %97, %104 : vector<16x128xi1>, vector<16x128xf32>
    %cst_39 = arith.constant dense<0.000000e+00> : vector<16xf32>
    %106 = vector.multi_reduction <add>, %105, %cst_39 [1] : vector<16x128xf32> to vector<16xf32>
    %107 = vector.shape_cast %106 : vector<16xf32> to vector<16x1xf32>
    %cst_40 = arith.constant 7.812500e-03 : f32
    %108 = vector.broadcast %cst_40 : f32 to vector<16x1xf32>
    %109 = arith.mulf %107, %108 : vector<16x1xf32>
    %110 = arith.mulf %105, %105 : vector<16x128xf32>
    %cst_41 = arith.constant dense<0.000000e+00> : vector<16xf32>
    %111 = vector.multi_reduction <add>, %110, %cst_41 [1] : vector<16x128xf32> to vector<16xf32>
    %112 = vector.shape_cast %111 : vector<16xf32> to vector<16x1xf32>
    %cst_42 = arith.constant 7.812500e-03 : f32
    %113 = vector.broadcast %cst_42 : f32 to vector<16x1xf32>
    %114 = arith.mulf %112, %113 : vector<16x1xf32>
    %115 = arith.mulf %109, %109 : vector<16x1xf32>
    %116 = arith.subf %114, %115 : vector<16x1xf32>
    %cst_43 = arith.constant 0.000000e+00 : f32
    %117 = vector.broadcast %cst_43 : f32 to vector<16x1xf32>
    %118 = arith.maximumf %116, %117 : vector<16x1xf32>
    %119 = vector.broadcast %109 : vector<16x1xf32> to vector<16x128xf32>
    %120 = arith.subf %105, %119 : vector<16x128xf32>
    %cst_44 = arith.constant 9.99999974E-6 : f32
    %121 = vector.broadcast %cst_44 : f32 to vector<16x1xf32>
    %122 = arith.addf %118, %121 : vector<16x1xf32>
    %123 = math.rsqrt %122 : vector<16x1xf32>
    %124 = vector.broadcast %123 : vector<16x1xf32> to vector<16x128xf32>
    %125 = arith.mulf %120, %124 : vector<16x128xf32>
    %126 = arith.truncf %125 : vector<16x128xf32> to vector<16x128xbf16>
    %c4 = arith.constant 4 : index
    %c0_45 = arith.constant 0 : index
    %c0_46 = arith.constant 0 : index
    %127 = vector.load %arg2[%c4, %c0_45, %c0_46] : memref<8x128x128xbf16, #tpu.memory_space<vmem>>, vector<1x128x128xbf16>
    %128 = vector.shape_cast %127 : vector<1x128x128xbf16> to vector<128x128xbf16>
    %cst_47 = arith.constant dense<0.000000e+00> : vector<16x128xf32>
    %129 = tpu.matmul %126, %128, %cst_47 {dimension_numbers = #tpu.dot_dimension_numbers<[1], [0], [0], [1], [0, 0, 1, 1], [], []>} : vector<16x128xbf16>, vector<128x128xbf16>, vector<16x128xf32> -> vector<16x128xf32>
    %130 = vector.extract_strided_slice %1 {offsets = [5, 0], sizes = [1, 128], strides = [1, 1]} : vector<11x128xf32> to vector<1x128xf32>
    %131 = vector.broadcast %130 : vector<1x128xf32> to vector<16x128xf32>
    %132 = arith.addf %129, %131 : vector<16x128xf32>
    %133 = arith.addf %132, %89 : vector<16x128xf32>
    %134 = arith.truncf %133 : vector<16x128xf32> to vector<16x128xbf16>
    %c5 = arith.constant 5 : index
    %c0_48 = arith.constant 0 : index
    %c0_49 = arith.constant 0 : index
    %135 = vector.load %arg2[%c5, %c0_48, %c0_49] : memref<8x128x128xbf16, #tpu.memory_space<vmem>>, vector<1x128x128xbf16>
    %136 = vector.shape_cast %135 : vector<1x128x128xbf16> to vector<128x128xbf16>
    %cst_50 = arith.constant dense<0.000000e+00> : vector<16x128xf32>
    %137 = tpu.matmul %134, %136, %cst_50 {dimension_numbers = #tpu.dot_dimension_numbers<[1], [0], [0], [1], [0, 0, 1, 1], [], []>} : vector<16x128xbf16>, vector<128x128xbf16>, vector<16x128xf32> -> vector<16x128xf32>
    %138 = arith.addf %7, %137 : vector<16x128xf32>
    %139 = vector.extract_strided_slice %1 {offsets = [6, 0], sizes = [1, 128], strides = [1, 1]} : vector<11x128xf32> to vector<1x128xf32>
    %140 = vector.broadcast %139 : vector<1x128xf32> to vector<16x128xf32>
    %141 = arith.addf %138, %140 : vector<16x128xf32>
    %cst_51 = arith.constant 0.000000e+00 : f32
    %142 = vector.broadcast %cst_51 : f32 to vector<16x128xf32>
    %143 = arith.cmpf ogt, %141, %142 : vector<16x128xf32>
    %cst_52 = arith.constant 0.000000e+00 : f32
    %144 = vector.broadcast %cst_52 : f32 to vector<16x128xf32>
    %145 = arith.minimumf %141, %144 : vector<16x128xf32>
    %146 = math.exp %145 : vector<16x128xf32>
    %cst_53 = arith.constant 1.000000e+00 : f32
    %147 = vector.broadcast %cst_53 : f32 to vector<16x128xf32>
    %148 = arith.subf %146, %147 : vector<16x128xf32>
    %149 = arith.select %143, %141, %148 : vector<16x128xi1>, vector<16x128xf32>
    %cst_54 = arith.constant dense<0.000000e+00> : vector<16xf32>
    %150 = vector.multi_reduction <add>, %149, %cst_54 [1] : vector<16x128xf32> to vector<16xf32>
    %151 = vector.shape_cast %150 : vector<16xf32> to vector<16x1xf32>
    %cst_55 = arith.constant 7.812500e-03 : f32
    %152 = vector.broadcast %cst_55 : f32 to vector<16x1xf32>
    %153 = arith.mulf %151, %152 : vector<16x1xf32>
    %154 = arith.mulf %149, %149 : vector<16x128xf32>
    %cst_56 = arith.constant dense<0.000000e+00> : vector<16xf32>
    %155 = vector.multi_reduction <add>, %154, %cst_56 [1] : vector<16x128xf32> to vector<16xf32>
    %156 = vector.shape_cast %155 : vector<16xf32> to vector<16x1xf32>
    %cst_57 = arith.constant 7.812500e-03 : f32
    %157 = vector.broadcast %cst_57 : f32 to vector<16x1xf32>
    %158 = arith.mulf %156, %157 : vector<16x1xf32>
    %159 = arith.mulf %153, %153 : vector<16x1xf32>
    %160 = arith.subf %158, %159 : vector<16x1xf32>
    %cst_58 = arith.constant 0.000000e+00 : f32
    %161 = vector.broadcast %cst_58 : f32 to vector<16x1xf32>
    %162 = arith.maximumf %160, %161 : vector<16x1xf32>
    %163 = vector.broadcast %153 : vector<16x1xf32> to vector<16x128xf32>
    %164 = arith.subf %149, %163 : vector<16x128xf32>
    %cst_59 = arith.constant 9.99999974E-6 : f32
    %165 = vector.broadcast %cst_59 : f32 to vector<16x1xf32>
    %166 = arith.addf %162, %165 : vector<16x1xf32>
    %167 = math.rsqrt %166 : vector<16x1xf32>
    %168 = vector.broadcast %167 : vector<16x1xf32> to vector<16x128xf32>
    %169 = arith.mulf %164, %168 : vector<16x128xf32>
    %170 = arith.truncf %169 : vector<16x128xf32> to vector<16x128xbf16>
    %c6 = arith.constant 6 : index
    %c0_60 = arith.constant 0 : index
    %c0_61 = arith.constant 0 : index
    %171 = vector.load %arg2[%c6, %c0_60, %c0_61] : memref<8x128x128xbf16, #tpu.memory_space<vmem>>, vector<1x128x128xbf16>
    %172 = vector.shape_cast %171 : vector<1x128x128xbf16> to vector<128x128xbf16>
    %cst_62 = arith.constant dense<0.000000e+00> : vector<16x128xf32>
    %173 = tpu.matmul %170, %172, %cst_62 {dimension_numbers = #tpu.dot_dimension_numbers<[1], [0], [0], [1], [0, 0, 1, 1], [], []>} : vector<16x128xbf16>, vector<128x128xbf16>, vector<16x128xf32> -> vector<16x128xf32>
    %174 = vector.extract_strided_slice %1 {offsets = [7, 0], sizes = [1, 128], strides = [1, 1]} : vector<11x128xf32> to vector<1x128xf32>
    %175 = vector.broadcast %174 : vector<1x128xf32> to vector<16x128xf32>
    %176 = arith.addf %173, %175 : vector<16x128xf32>
    %177 = arith.addf %176, %133 : vector<16x128xf32>
    %178 = arith.truncf %177 : vector<16x128xf32> to vector<16x128xbf16>
    %c7 = arith.constant 7 : index
    %c0_63 = arith.constant 0 : index
    %c0_64 = arith.constant 0 : index
    %179 = vector.load %arg2[%c7, %c0_63, %c0_64] : memref<8x128x128xbf16, #tpu.memory_space<vmem>>, vector<1x128x128xbf16>
    %180 = vector.shape_cast %179 : vector<1x128x128xbf16> to vector<128x128xbf16>
    %cst_65 = arith.constant dense<0.000000e+00> : vector<16x128xf32>
    %181 = tpu.matmul %178, %180, %cst_65 {dimension_numbers = #tpu.dot_dimension_numbers<[1], [0], [0], [1], [0, 0, 1, 1], [], []>} : vector<16x128xbf16>, vector<128x128xbf16>, vector<16x128xf32> -> vector<16x128xf32>
    %182 = vector.extract_strided_slice %1 {offsets = [8, 0], sizes = [1, 128], strides = [1, 1]} : vector<11x128xf32> to vector<1x128xf32>
    %183 = vector.broadcast %182 : vector<1x128xf32> to vector<16x128xf32>
    %184 = arith.addf %181, %183 : vector<16x128xf32>
    %cst_66 = arith.constant 0.000000e+00 : f32
    %185 = vector.broadcast %cst_66 : f32 to vector<16x128xf32>
    %186 = arith.maximumf %184, %185 : vector<16x128xf32>
    %cst_67 = arith.constant dense<0.000000e+00> : vector<16xf32>
    %187 = vector.multi_reduction <add>, %186, %cst_67 [1] : vector<16x128xf32> to vector<16xf32>
    %188 = vector.shape_cast %187 : vector<16xf32> to vector<16x1xf32>
    %cst_68 = arith.constant 3.125000e-02 : f32
    %189 = vector.broadcast %cst_68 : f32 to vector<16x1xf32>
    %190 = arith.mulf %188, %189 : vector<16x1xf32>
    %191 = arith.mulf %186, %186 : vector<16x128xf32>
    %cst_69 = arith.constant dense<0.000000e+00> : vector<16xf32>
    %192 = vector.multi_reduction <add>, %191, %cst_69 [1] : vector<16x128xf32> to vector<16xf32>
    %193 = vector.shape_cast %192 : vector<16xf32> to vector<16x1xf32>
    %cst_70 = arith.constant 3.125000e-02 : f32
    %194 = vector.broadcast %cst_70 : f32 to vector<16x1xf32>
    %195 = arith.mulf %193, %194 : vector<16x1xf32>
    %196 = arith.mulf %190, %190 : vector<16x1xf32>
    %197 = arith.subf %195, %196 : vector<16x1xf32>
    %cst_71 = arith.constant 0.000000e+00 : f32
    %198 = vector.broadcast %cst_71 : f32 to vector<16x1xf32>
    %199 = arith.maximumf %197, %198 : vector<16x1xf32>
    %200 = vector.broadcast %190 : vector<16x1xf32> to vector<16x128xf32>
    %201 = arith.subf %186, %200 : vector<16x128xf32>
    %cst_72 = arith.constant 9.99999974E-6 : f32
    %202 = vector.broadcast %cst_72 : f32 to vector<16x1xf32>
    %203 = arith.addf %199, %202 : vector<16x1xf32>
    %204 = math.rsqrt %203 : vector<16x1xf32>
    %205 = vector.broadcast %204 : vector<16x1xf32> to vector<16x128xf32>
    %206 = arith.mulf %201, %205 : vector<16x128xf32>
    %207 = tpu.iota {dimensions = array<i32: 0>} : vector<2x16xi32>
    %208 = tpu.iota {dimensions = array<i32: 1>} : vector<2x16xi32>
    %c8_i32 = arith.constant 8 : i32
    %209 = vector.broadcast %c8_i32 : i32 to vector<2x16xi32>
    %210 = arith.muli %207, %209 : vector<2x16xi32>
    %211 = arith.subi %208, %210 : vector<2x16xi32>
    %c0_i32 = arith.constant 0 : i32
    %212 = vector.broadcast %c0_i32 : i32 to vector<2x16xi32>
    %213 = arith.cmpi sge, %211, %212 : vector<2x16xi32>
    %c8_i32_73 = arith.constant 8 : i32
    %214 = vector.broadcast %c8_i32_73 : i32 to vector<2x16xi32>
    %215 = arith.cmpi slt, %211, %214 : vector<2x16xi32>
    %216 = arith.andi %213, %215 : vector<2x16xi1>
    %cst_74 = arith.constant 1.250000e-01 : f32
    %cst_75 = arith.constant 0.000000e+00 : f32
    %217 = vector.broadcast %cst_74 : f32 to vector<2x16xf32>
    %218 = vector.broadcast %cst_75 : f32 to vector<2x16xf32>
    %219 = arith.select %216, %217, %218 : vector<2x16xi1>, vector<2x16xf32>
    %cst_76 = arith.constant dense<0.000000e+00> : vector<2x128xf32>
    %220 = tpu.matmul %219, %206, %cst_76 {dimension_numbers = #tpu.dot_dimension_numbers<[1], [0], [0], [1], [0, 0, 1, 1], [], []>} : vector<2x16xf32>, vector<16x128xf32>, vector<2x128xf32> -> vector<2x128xf32>
    %221 = vector.extract_strided_slice %1 {offsets = [9, 0], sizes = [1, 128], strides = [1, 1]} : vector<11x128xf32> to vector<1x128xf32>
    %222 = vector.broadcast %221 : vector<1x128xf32> to vector<2x128xf32>
    %223 = arith.mulf %220, %222 : vector<2x128xf32>
    %cst_77 = arith.constant dense<0.000000e+00> : vector<2xf32>
    %224 = vector.multi_reduction <add>, %223, %cst_77 [1] : vector<2x128xf32> to vector<2xf32>
    %225 = vector.shape_cast %224 : vector<2xf32> to vector<2x1xf32>
    %226 = vector.extract_strided_slice %1 {offsets = [10, 0], sizes = [1, 1], strides = [1, 1]} : vector<11x128xf32> to vector<1x1xf32>
    %227 = vector.broadcast %226 : vector<1x1xf32> to vector<2x1xf32>
    %228 = arith.addf %225, %227 : vector<2x1xf32>
    %c0_78 = arith.constant 0 : index
    %c0_79 = arith.constant 0 : index
    %229 = vector.load %arg4[%c0_78, %c0_79] : memref<2x1xf32, #tpu.memory_space<vmem>>, vector<2x1xf32>
    tpu.vector_store %arg4[%c0_78, %c0_79], %228 {strides = array<i32>} : memref<2x1xf32, #tpu.memory_space<vmem>>, vector<2x1xf32>,
    return
  }
}

</mosaic_0001>

<llo_original>
// kernel: dsd_pro_forward.1
$region0: #{dsd_pro_forward.1}
  #allocation0 [shape = 'u32[]', space=smem, size = 0x4, offset = 0x4, fixed_abs, tag = 'smem constant byte address 0x4 - core index']
  #allocation1 [shape = 'u32[144,128]{1,0:T(1,128)}', space=vmem, size = 0x12000, scoped, tag = 'internal scratch']
  %s0 = inlined_call_operand.vmem [shape: bf16[16,64], index: 0, kind: input, shape index: {}]
  %s1 = inlined_call_operand.hbm [shape: bf16[64,512], index: 1, kind: input, shape index: {}]
  %s2 = inlined_call_operand.hbm [shape: bf16[8,128,128], index: 2, kind: input, shape index: {}]
  %s3 = inlined_call_operand.vmem [shape: f32[11,128], index: 3, kind: input, shape index: {}]
  %s4 = inlined_call_operand.vmem [shape: f32[2,1], index: 4, kind: output, shape index: {}]
  %s5 = sld [smem:[#allocation0]]
  $region34: #{dsd_pro_forward.1} parent=0
    _
  %s7 = ssub.s32 1, %s5
  %s8 = scalar_select 0, %s7, %s5
  $region1: #{dsd_pro_forward.1} parent=0
    #allocation2 [shape = 'u8[65536]{0}', space=vmem, size = 0x10000, scoped, tag = 'input window, operand 1, single buffered']
    #allocation3 [shape = 's32[1]{0}', space=sflag, size = 0x4, scoped, tag = 'scoped memory for dsd_pro_forward.1']
    #allocation4 [shape = 'u8[262144]{0}', space=vmem, size = 0x40000, scoped, tag = 'input window, operand 2, single buffered']
    #allocation5 [shape = 's32[1]{0}', space=sflag, size = 0x4, scoped, tag = 'scoped memory for dsd_pro_forward.1']
    %9 = vsyncpa [#allocation3], 0
    %10 = vsyncpa [#allocation5], 0
    // Predicated region
    $region2: #{dsd_pro_forward.1} parent=1 // pred_check
      _
    $region3: #{dsd_pro_forward.1} parent=1 // pred_check_branch
      %12 = sbr.rel (0) target = $region5
    $region4: #{dsd_pro_forward.1} parent=1 // pred_region
      _
    $region5: #{dsd_pro_forward.1} parent=1 // pred_fallthru
      _
    // Predicated region
    $region6: #{dsd_pro_forward.1} parent=1 // pred_check
      _
    $region7: #{dsd_pro_forward.1} parent=1 // pred_check_branch
      %14 = sbr.rel (0) target = $region9
    $region8: #{dsd_pro_forward.1} parent=1 // pred_region
      %s16 = ssub.s32 2048, 2048
      %17 = vsyncadd [#allocation3], %s16
      %s18 = sshll.u32 [#allocation2], 4
      %s19 = int_to_ptr.vmem [resolvable:$true] %s18
      %24 = dma.hbm_to_vmem [thread:$0]  %s1, 2048, %s19, [#allocation3], 256, 256, 16
    $region9: #{dsd_pro_forward.1} parent=1 // pred_fallthru
      _
    // Predicated region
    $region10: #{dsd_pro_forward.1} parent=1 // pred_check
      _
    $region11: #{dsd_pro_forward.1} parent=1 // pred_check_branch
      %26 = sbr.rel (0) target = $region13
    $region12: #{dsd_pro_forward.1} parent=1 // pred_region
      %s28 = ssub.s32 8192, 8192
      %29 = vsyncadd [#allocation5], %s28
      %s30 = sshll.u32 [#allocation4], 4
      %s31 = int_to_ptr.vmem [resolvable:$true] %s30
      %36 = dma.hbm_to_vmem [thread:$0]  %s2, 8192, %s31, [#allocation5], 64, 64, 4
    $region13: #{dsd_pro_forward.1} parent=1 // pred_fallthru
      _
    // Predicated region
    $region14: #{dsd_pro_forward.1} parent=1 // pred_check
      _
    $region15: #{dsd_pro_forward.1} parent=1 // pred_check_branch
      %38 = sbr.rel (0) target = $region17
    $region16: #{dsd_pro_forward.1} parent=1 // pred_region
      _
    $region17: #{dsd_pro_forward.1} parent=1 // pred_fallthru
      _
    // Predicated region
    $region18: #{dsd_pro_forward.1} parent=1 // pred_check
      _
    $region19: #{dsd_pro_forward.1} parent=1 // pred_check_branch
      %40 = sbr.rel (0) target = $region21
    $region20: #{dsd_pro_forward.1} parent=1 // pred_region
      %41 = dma.done [#allocation3], 2048
    $region21: #{dsd_pro_forward.1} parent=1 // pred_fallthru
      _
    // Predicated region
    $region22: #{dsd_pro_forward.1} parent=1 // pred_check
      _
    $region23: #{dsd_pro_forward.1} parent=1 // pred_check_branch
      %43 = sbr.rel (0) target = $region25
    $region24: #{dsd_pro_forward.1} parent=1 // pred_region
      %44 = dma.done [#allocation5], 8192
    $region25: #{dsd_pro_forward.1} parent=1 // pred_fallthru
      _
    %v46 = vld [vmem:[%s0] sm:$0xf]
    %v47 = vld [vmem:[%s0 + $0x4] sm:$0xf]
    %v48 = vld [vmem:[%s3] sm:$0xff]
    %v49 = vld [vmem:[%s3 + $0x8] sm:$0x7]
    %v50 = vld [vmem:[#allocation2] sm:$0xff]
    %v51 = vld [vmem:[#allocation2 + $0x8] sm:$0xff]
    %v52 = vld [vmem:[#allocation2 + $0x10] sm:$0xff]
    %v53 = vld [vmem:[#allocation2 + $0x18] sm:$0xff]
    %v54 = vld [vmem:[#allocation2 + $0x20] sm:$0xff]
    %v55 = vld [vmem:[#allocation2 + $0x28] sm:$0xff]
    %v56 = vld [vmem:[#allocation2 + $0x30] sm:$0xff]
    %v57 = vld [vmem:[#allocation2 + $0x38] sm:$0xff]
    %v58 = vld [vmem:[#allocation2 + $0x40] sm:$0xff]
    %v59 = vld [vmem:[#allocation2 + $0x48] sm:$0xff]
    %v60 = vld [vmem:[#allocation2 + $0x50] sm:$0xff]
    %v61 = vld [vmem:[#allocation2 + $0x58] sm:$0xff]
    %v62 = vld [vmem:[#allocation2 + $0x60] sm:$0xff]
    %v63 = vld [vmem:[#allocation2 + $0x68] sm:$0xff]
    %v64 = vld [vmem:[#allocation2 + $0x70] sm:$0xff]
    %v65 = vld [vmem:[#allocation2 + $0x78] sm:$0xff]
    %v68 = vunpack.c.l.b16 %v46
    %v69 = vunpack.c.l.b16 %v47
    %v70 = vpack.c.b16 %v69, %v68
    %v87 = vunpack.c.l.b16 %v50
    %v88 = vunpack.c.h.b16 %v50
    %v89 = vunpack.c.l.b16 %v51
    %v90 = vunpack.c.h.b16 %v51
    %v91 = vunpack.c.l.b16 %v52
    %v92 = vunpack.c.h.b16 %v52
    %v93 = vunpack.c.l.b16 %v53
    %v94 = vunpack.c.h.b16 %v53
    %v95 = vunpack.c.l.b16 %v54
    %v96 = vunpack.c.h.b16 %v54
    %v97 = vunpack.c.l.b16 %v55
    %v98 = vunpack.c.h.b16 %v55
    %v99 = vunpack.c.l.b16 %v56
    %v100 = vunpack.c.h.b16 %v56
    %v101 = vunpack.c.l.b16 %v57
    %v102 = vunpack.c.h.b16 %v57
    %v103 = vunpack.c.l.b16 %v58
    %v104 = vunpack.c.h.b16 %v58
    %v105 = vunpack.c.l.b16 %v59
    %v106 = vunpack.c.h.b16 %v59
    %v107 = vunpack.c.l.b16 %v60
    %v108 = vunpack.c.h.b16 %v60
    %v109 = vunpack.c.l.b16 %v61
    %v110 = vunpack.c.h.b16 %v61
    %v111 = vunpack.c.l.b16 %v62
    %v112 = vunpack.c.h.b16 %v62
    %v113 = vunpack.c.l.b16 %v63
    %v114 = vunpack.c.h.b16 %v63
    %v115 = vunpack.c.l.b16 %v64
    %v116 = vunpack.c.h.b16 %v64
    %v117 = vunpack.c.l.b16 %v65
    %v118 = vunpack.c.h.b16 %v65
    %v119 = vpack.c.b16 %v91, %v87
    %v120 = vpack.c.b16 %v92, %v88
    %v121 = vpack.c.b16 %v93, %v89
    %v122 = vpack.c.b16 %v94, %v90
    %v123 = vpack.c.b16 %v99, %v95
    %v124 = vpack.c.b16 %v100, %v96
    %v125 = vpack.c.b16 %v101, %v97
    %v126 = vpack.c.b16 %v102, %v98
    %v127 = vpack.c.b16 %v107, %v103
    %v128 = vpack.c.b16 %v108, %v104
    %v129 = vpack.c.b16 %v109, %v105
    %v130 = vpack.c.b16 %v110, %v106
    %v131 = vpack.c.b16 %v115, %v111
    %v132 = vpack.c.b16 %v116, %v112
    %v133 = vpack.c.b16 %v117, %v113
    %v134 = vpack.c.b16 %v118, %v114
    %vm151 = vcmask 523264
    %v153 = vsel %vm151, %v70, 0
    %155 = vmatprep.subr.bf16.mxu0 %v120
    %156 = vmatpush1.bf16.msra.mxu0 %v119
    %157 = vmatprep.subr.bf16.mxu0 %v124
    %158 = vmatpush1.bf16.msra.mxu0 %v123
    %159 = vmatprep.subr.bf16.mxu0 %v128
    %160 = vmatpush1.bf16.msra.mxu0 %v127
    %161 = vmatprep.subr.bf16.mxu0 %v132
    %162 = vmatpush1.bf16.msra.mxu0 %v131
    %163 = vmatprep.subr.bf16.mxu0 0
    %164 = vmatpush1.bf16.msra.mxu0 0
    %165 = vmatprep.subr.bf16.mxu0 0
    %166 = vmatpush1.bf16.msra.mxu0 0
    %167 = vmatprep.subr.bf16.mxu0 0
    %168 = vmatpush1.bf16.msra.mxu0 0
    %169 = vmatprep.subr.bf16.mxu0 0
    %170 = vmatpush1.bf16.msra.mxu0 0
    %171 = vmatprep.subr.bf16.mxu0 0
    %172 = vmatpush1.bf16.msra.mxu0 0
    %173 = vmatprep.subr.bf16.mxu0 0
    %174 = vmatpush1.bf16.msra.mxu0 0
    %175 = vmatprep.subr.bf16.mxu0 0
    %176 = vmatpush1.bf16.msra.mxu0 0
    %177 = vmatprep.subr.bf16.mxu0 0
    %178 = vmatpush1.bf16.msra.mxu0 0
    %179 = vmatprep.subr.bf16.mxu0 0
    %180 = vmatpush1.bf16.msra.mxu0 0
    %181 = vmatprep.subr.bf16.mxu0 0
    %182 = vmatpush1.bf16.msra.mxu0 0
    %183 = vmatprep.subr.bf16.mxu0 0
    %184 = vmatpush1.bf16.msra.mxu0 0
    %185 = vmatprep.subr.bf16.mxu0 0
    %186 = vmatpush1.bf16.msra.mxu0 0
    %187 = vmatprep.mubr.bf16.mxu0 0
    %188 = vmatmul.mubr.bf16.gmra.mrb[0].mxu0 %v153
    %v189 = vpop.f32.mrb[0].mxu0
    %v190 = vadd.f32 0.0, %v189
    %v191 = vpop.f32.mrb[0].mxu0
    %v192 = vadd.f32 0.0, %v191
    %v193 = vpop.f32.mrb[0].mxu0
    %v194 = vadd.f32 0.0, %v193
    %v195 = vpop.f32.mrb[0].mxu0
    %v196 = vadd.f32 0.0, %v195
    %197 = vdwg.mxu0
    %198 = vmatprep.subr.bf16.mxu0 %v122
    %199 = vmatpush1.bf16.msra.mxu0 %v121
    %200 = vmatprep.subr.bf16.mxu0 %v126
    %201 = vmatpush1.bf16.msra.mxu0 %v125
    %202 = vmatprep.subr.bf16.mxu0 %v130
    %203 = vmatpush1.bf16.msra.mxu0 %v129
    %204 = vmatprep.subr.bf16.mxu0 %v134
    %205 = vmatpush1.bf16.msra.mxu0 %v133
    %206 = vmatprep.subr.bf16.mxu0 0
    %207 = vmatpush1.bf16.msra.mxu0 0
    %208 = vmatprep.subr.bf16.mxu0 0
    %209 = vmatpush1.bf16.msra.mxu0 0
    %210 = vmatprep.subr.bf16.mxu0 0
    %211 = vmatpush1.bf16.msra.mxu0 0
    %212 = vmatprep.subr.bf16.mxu0 0
    %213 = vmatpush1.bf16.msra.mxu0 0
    %214 = vmatprep.subr.bf16.mxu0 0
    %215 = vmatpush1.bf16.msra.mxu0 0
    %216 = vmatprep.subr.bf16.mxu0 0
    %217 = vmatpush1.bf16.msra.mxu0 0
    %218 = vmatprep.subr.bf16.mxu0 0
    %219 = vmatpush1.bf16.msra.mxu0 0
    %220 = vmatprep.subr.bf16.mxu0 0
    %221 = vmatpush1.bf16.msra.mxu0 0
    %222 = vmatprep.subr.bf16.mxu0 0
    %223 = vmatpush1.bf16.msra.mxu0 0
    %224 = vmatprep.subr.bf16.mxu0 0
    %225 = vmatpush1.bf16.msra.mxu0 0
    %226 = vmatprep.subr.bf16.mxu0 0
    %227 = vmatpush1.bf16.msra.mxu0 0
    %228 = vmatprep.subr.bf16.mxu0 0
    %229 = vmatpush1.bf16.msra.mxu0 0
    %230 = vmatprep.mubr.bf16.mxu0 0
    %231 = vmatmul.mubr.bf16.gmra.mrb[0].mxu0 %v153
    %v232 = vpop.f32.mrb[0].mxu0
    %v233 = vadd.f32 0.0, %v232
    %v234 = vpop.f32.mrb[0].mxu0
    %v235 = vadd.f32 0.0, %v234
    %v236 = vpop.f32.mrb[0].mxu0
    %v237 = vadd.f32 0.0, %v236
    %v238 = vpop.f32.mrb[0].mxu0
    %v239 = vadd.f32 0.0, %v238
    %240 = vdwg.mxu0
    %v241 = vlaneseq
    %v242 = vshrl.u32 %v241, 7
    %v243 = vsub.s32 0, %v242
    %v244 = vrot.slane %v48, %v243
    %v245 = vadd.f32 %v190, %v244
    %v246 = vadd.f32 %v194, %v244
    %vm247 = vcmp.gt.f32.partialorder %v245, 0.0
    %vm248 = vcmp.gt.f32.partialorder %v246, 0.0
    %v249 = vmin.f32 %v245, 0.0
    %v250 = vmin.f32 %v246, 0.0
    %v251 = vmul.f32 %v249, 1.442695
    %v252 = vpow.pop %v251
    %v253 = vmul.f32 %v250, 1.442695
    %v254 = vpow.pop %v253
    %v255 = vsub.f32 %v252, 1.0
    %v256 = vsub.f32 %v254, 1.0
    %v257 = vsel %vm247, %v245, %v255
    %v258 = vsel %vm248, %v246, %v256
    %259 = vadd.xlane.f32.xlu0 %v257
    %v260 = vpop.xlane.xlu0 %259
    %261 = vadd.xlane.f32.xlu0 %v258
    %v262 = vpop.xlane.xlu0 %261
    %v263 = vmul.f32 %v260, 0.0078125
    %v264 = vmul.f32 %v262, 0.0078125
    %v265 = vmul.f32 %v257, %v257
    %v266 = vmul.f32 %v258, %v258
    %267 = vadd.xlane.f32.xlu0 %v265
    %v268 = vpop.xlane.xlu0 %267
    %269 = vadd.xlane.f32.xlu0 %v266
    %v270 = vpop.xlane.xlu0 %269
    %v271 = vmul.f32 %v268, 0.0078125
    %v272 = vmul.f32 %v270, 0.0078125
    %v273 = vmul.f32 %v263, %v263
    %v274 = vmul.f32 %v264, %v264
    %v275 = vsub.f32 %v271, %v273
    %v276 = vsub.f32 %v272, %v274
    %v277 = vmax.f32 %v275, 0.0
    %v278 = vmax.f32 %v276, 0.0
    %v279 = vsub.f32 %v257, %v263
    %v280 = vsub.f32 %v258, %v264
    %v281 = vadd.f32 %v277, 1e-05
    %v282 = vadd.f32 %v278, 1e-05
    %v283 = vrsqrt.pop %v281
    %v284 = vrsqrt.pop %v282
    %v285 = vmul.f32 %v279, %v283
    %v286 = vmul.f32 %v280, %v284
    %v287 = vpack.c.bf16 %v286, %v285
    %v288 = vld [vmem:[#allocation4] sm:$0xf]
    %v289 = vld [vmem:[#allocation4 + $0x4] sm:$0xf]
    %v290 = vld [vmem:[#allocation4 + $0x8] sm:$0xf]
    %v291 = vld [vmem:[#allocation4 + $0xc] sm:$0xf]
    %v292 = vld [vmem:[#allocation4 + $0x10] sm:$0xf]
    %v293 = vld [vmem:[#allocation4 + $0x14] sm:$0xf]
    %v294 = vld [vmem:[#allocation4 + $0x18] sm:$0xf]
    %v295 = vld [vmem:[#allocation4 + $0x1c] sm:$0xf]
    %v296 = vld [vmem:[#allocation4 + $0x20] sm:$0xf]
    %v297 = vld [vmem:[#allocation4 + $0x24] sm:$0xf]
    %v298 = vld [vmem:[#allocation4 + $0x28] sm:$0xf]
    %v299 = vld [vmem:[#allocation4 + $0x2c] sm:$0xf]
    %v300 = vld [vmem:[#allocation4 + $0x30] sm:$0xf]
    %v301 = vld [vmem:[#allocation4 + $0x34] sm:$0xf]
    %v302 = vld [vmem:[#allocation4 + $0x38] sm:$0xf]
    %v303 = vld [vmem:[#allocation4 + $0x3c] sm:$0xf]
    %v304 = vlaneseq
    %v305 = vshrl.u32 %v304, 7
    %v306 = vsub.s32 1, %v305
    %v307 = vrot.slane %v48, %v306
    %v324 = vunpack.c.l.b16 %v288
    %v325 = vunpack.c.l.b16 %v289
    %v326 = vunpack.c.l.b16 %v290
    %v327 = vunpack.c.l.b16 %v291
    %v328 = vunpack.c.l.b16 %v292
    %v329 = vunpack.c.l.b16 %v293
    %v330 = vunpack.c.l.b16 %v294
    %v331 = vunpack.c.l.b16 %v295
    %v332 = vunpack.c.l.b16 %v296
    %v333 = vunpack.c.l.b16 %v297
    %v334 = vunpack.c.l.b16 %v298
    %v335 = vunpack.c.l.b16 %v299
    %v336 = vunpack.c.l.b16 %v300
    %v337 = vunpack.c.l.b16 %v301
    %v338 = vunpack.c.l.b16 %v302
    %v339 = vunpack.c.l.b16 %v303
    %v340 = vpack.c.b16 %v325, %v324
    %v341 = vpack.c.b16 %v327, %v326
    %v342 = vpack.c.b16 %v329, %v328
    %v343 = vpack.c.b16 %v331, %v330
    %v344 = vpack.c.b16 %v333, %v332
    %v345 = vpack.c.b16 %v335, %v334
    %v346 = vpack.c.b16 %v337, %v336
    %v347 = vpack.c.b16 %v339, %v338
    %356 = vmatprep.subr.bf16.mxu0 0
    %357 = vmatpush1.bf16.msra.mxu0 %v340
    %358 = vmatprep.subr.bf16.mxu0 0
    %359 = vmatpush1.bf16.msra.mxu0 %v341
    %360 = vmatprep.subr.bf16.mxu0 0
    %361 = vmatpush1.bf16.msra.mxu0 %v342
    %362 = vmatprep.subr.bf16.mxu0 0
    %363 = vmatpush1.bf16.msra.mxu0 %v343
    %364 = vmatprep.subr.bf16.mxu0 0
    %365 = vmatpush1.bf16.msra.mxu0 %v344
    %366 = vmatprep.subr.bf16.mxu0 0
    %367 = vmatpush1.bf16.msra.mxu0 %v345
    %368 = vmatprep.subr.bf16.mxu0 0
    %369 = vmatpush1.bf16.msra.mxu0 %v346
    %370 = vmatprep.subr.bf16.mxu0 0
    %371 = vmatpush1.bf16.msra.mxu0 %v347
    %372 = vmatprep.subr.bf16.mxu0 0
    %373 = vmatpush1.bf16.msra.mxu0 0
    %374 = vmatprep.subr.bf16.mxu0 0
    %375 = vmatpush1.bf16.msra.mxu0 0
    %376 = vmatprep.subr.bf16.mxu0 0
    %377 = vmatpush1.bf16.msra.mxu0 0
    %378 = vmatprep.subr.bf16.mxu0 0
    %379 = vmatpush1.bf16.msra.mxu0 0
    %380 = vmatprep.subr.bf16.mxu0 0
    %381 = vmatpush1.bf16.msra.mxu0 0
    %382 = vmatprep.subr.bf16.mxu0 0
    %383 = vmatpush1.bf16.msra.mxu0 0
    %384 = vmatprep.subr.bf16.mxu0 0
    %385 = vmatpush1.bf16.msra.mxu0 0
    %386 = vmatprep.subr.bf16.mxu0 0
    %387 = vmatpush1.bf16.msra.mxu0 0
    %388 = vmatprep.mubr.bf16.mxu0 0
    %389 = vmatmul.mubr.bf16.gmra.mrb[0].mxu0 %v287
    %v390 = vpop.f32.mrb[0].mxu0
    %v391 = vadd.f32 %v307, %v390
    %v392 = vpop.f32.mrb[0].mxu0
    %v393 = vpop.f32.mrb[0].mxu0
    %v394 = vadd.f32 %v307, %v393
    %v395 = vpop.f32.mrb[0].mxu0
    %396 = vdwg.mxu0
    %v397 = vpack.c.bf16 %v394, %v391
    %s398 = scalar_lea.vmem [#allocation4], 64
    %v399 = vld [vmem:[%s398] sm:$0xf]
    %v400 = vld [vmem:[%s398 + $0x4] sm:$0xf]
    %v401 = vld [vmem:[%s398 + $0x8] sm:$0xf]
    %v402 = vld [vmem:[%s398 + $0xc] sm:$0xf]
    %v403 = vld [vmem:[%s398 + $0x10] sm:$0xf]
    %v404 = vld [vmem:[%s398 + $0x14] sm:$0xf]
    %v405 = vld [vmem:[%s398 + $0x18] sm:$0xf]
    %v406 = vld [vmem:[%s398 + $0x1c] sm:$0xf]
    %v407 = vld [vmem:[%s398 + $0x20] sm:$0xf]
    %v408 = vld [vmem:[%s398 + $0x24] sm:$0xf]
    %v409 = vld [vmem:[%s398 + $0x28] sm:$0xf]
    %v410 = vld [vmem:[%s398 + $0x2c] sm:$0xf]
    %v411 = vld [vmem:[%s398 + $0x30] sm:$0xf]
    %v412 = vld [vmem:[%s398 + $0x34] sm:$0xf]
    %v413 = vld [vmem:[%s398 + $0x38] sm:$0xf]
    %v414 = vld [vmem:[%s398 + $0x3c] sm:$0xf]
    %v431 = vunpack.c.l.b16 %v399
    %v432 = vunpack.c.l.b16 %v400
    %v433 = vunpack.c.l.b16 %v401
    %v434 = vunpack.c.l.b16 %v402
    %v435 = vunpack.c.l.b16 %v403
    %v436 = vunpack.c.l.b16 %v404
    %v437 = vunpack.c.l.b16 %v405
    %v438 = vunpack.c.l.b16 %v406
    %v439 = vunpack.c.l.b16 %v407
    %v440 = vunpack.c.l.b16 %v408
    %v441 = vunpack.c.l.b16 %v409
    %v442 = vunpack.c.l.b16 %v410
    %v443 = vunpack.c.l.b16 %v411
    %v444 = vunpack.c.l.b16 %v412
    %v445 = vunpack.c.l.b16 %v413
    %v446 = vunpack.c.l.b16 %v414
    %v447 = vpack.c.b16 %v432, %v431
    %v448 = vpack.c.b16 %v434, %v433
    %v449 = vpack.c.b16 %v436, %v435
    %v450 = vpack.c.b16 %v438, %v437
    %v451 = vpack.c.b16 %v440, %v439
    %v452 = vpack.c.b16 %v442, %v441
    %v453 = vpack.c.b16 %v444, %v443
    %v454 = vpack.c.b16 %v446, %v445
    %463 = vmatprep.subr.bf16.mxu0 0
    %464 = vmatpush1.bf16.msra.mxu0 %v447
    %465 = vmatprep.subr.bf16.mxu0 0
    %466 = vmatpush1.bf16.msra.mxu0 %v448
    %467 = vmatprep.subr.bf16.mxu0 0
    %468 = vmatpush1.bf16.msra.mxu0 %v449
    %469 = vmatprep.subr.bf16.mxu0 0
    %470 = vmatpush1.bf16.msra.mxu0 %v450
    %471 = vmatprep.subr.bf16.mxu0 0
    %472 = vmatpush1.bf16.msra.mxu0 %v451
    %473 = vmatprep.subr.bf16.mxu0 0
    %474 = vmatpush1.bf16.msra.mxu0 %v452
    %475 = vmatprep.subr.bf16.mxu0 0
    %476 = vmatpush1.bf16.msra.mxu0 %v453
    %477 = vmatprep.subr.bf16.mxu0 0
    %478 = vmatpush1.bf16.msra.mxu0 %v454
    %479 = vmatprep.subr.bf16.mxu0 0
    %480 = vmatpush1.bf16.msra.mxu0 0
    %481 = vmatprep.subr.bf16.mxu0 0
    %482 = vmatpush1.bf16.msra.mxu0 0
    %483 = vmatprep.subr.bf16.mxu0 0
    %484 = vmatpush1.bf16.msra.mxu0 0
    %485 = vmatprep.subr.bf16.mxu0 0
    %486 = vmatpush1.bf16.msra.mxu0 0
    %487 = vmatprep.subr.bf16.mxu0 0
    %488 = vmatpush1.bf16.msra.mxu0 0
    %489 = vmatprep.subr.bf16.mxu0 0
    %490 = vmatpush1.bf16.msra.mxu0 0
    %491 = vmatprep.subr.bf16.mxu0 0
    %492 = vmatpush1.bf16.msra.mxu0 0
    %493 = vmatprep.subr.bf16.mxu0 0
    %494 = vmatpush1.bf16.msra.mxu0 0
    %495 = vmatprep.mubr.bf16.mxu0 0
    %496 = vmatmul.mubr.bf16.gmra.mrb[0].mxu0 %v397
    %v497 = vpop.f32.mrb[0].mxu0
    %v498 = vadd.f32 0.0, %v497
    %v499 = vpop.f32.mrb[0].mxu0
    %v500 = vpop.f32.mrb[0].mxu0
    %v501 = vadd.f32 0.0, %v500
    %v502 = vpop.f32.mrb[0].mxu0
    %503 = vdwg.mxu0
    %v504 = vadd.f32 %v192, %v498
    %v505 = vadd.f32 %v196, %v501
    %v506 = vlaneseq
    %v507 = vshrl.u32 %v506, 7
    %v508 = vsub.s32 2, %v507
    %v509 = vrot.slane %v48, %v508
    %v510 = vadd.f32 %v504, %v509
    %v511 = vadd.f32 %v505, %v509
    %vm512 = vcmp.gt.f32.partialorder %v510, 0.0
    %vm513 = vcmp.gt.f32.partialorder %v511, 0.0
    %v514 = vmin.f32 %v510, 0.0
    %v515 = vmin.f32 %v511, 0.0
    %v516 = vmul.f32 %v514, 1.442695
    %v517 = vpow.pop %v516
    %v518 = vmul.f32 %v515, 1.442695
    %v519 = vpow.pop %v518
    %v520 = vsub.f32 %v517, 1.0
    %v521 = vsub.f32 %v519, 1.0
    %v522 = vsel %vm512, %v510, %v520
    %v523 = vsel %vm513, %v511, %v521
    %524 = vadd.xlane.f32.xlu0 %v522
    %v525 = vpop.xlane.xlu0 %524
    %526 = vadd.xlane.f32.xlu0 %v523
    %v527 = vpop.xlane.xlu0 %526
    %v528 = vmul.f32 %v525, 0.0078125
    %v529 = vmul.f32 %v527, 0.0078125
    %v530 = vmul.f32 %v522, %v522
    %v531 = vmul.f32 %v523, %v523
    %532 = vadd.xlane.f32.xlu0 %v530
    %v533 = vpop.xlane.xlu0 %532
    %534 = vadd.xlane.f32.xlu0 %v531
    %v535 = vpop.xlane.xlu0 %534
    %v536 = vmul.f32 %v533, 0.0078125
    %v537 = vmul.f32 %v535, 0.0078125
    %v538 = vmul.f32 %v528, %v528
    %v539 = vmul.f32 %v529, %v529
    %v540 = vsub.f32 %v536, %v538
    %v541 = vsub.f32 %v537, %v539
    %v542 = vmax.f32 %v540, 0.0
    %v543 = vmax.f32 %v541, 0.0
    %v544 = vsub.f32 %v522, %v528
    %v545 = vsub.f32 %v523, %v529
    %v546 = vadd.f32 %v542, 1e-05
    %v547 = vadd.f32 %v543, 1e-05
    %v548 = vrsqrt.pop %v546
    %v549 = vrsqrt.pop %v547
    %v550 = vmul.f32 %v544, %v548
    %v551 = vmul.f32 %v545, %v549
    %v552 = vpack.c.bf16 %v551, %v550
    %s553 = scalar_lea.vmem [#allocation4], 128
    %v554 = vld [vmem:[%s553] sm:$0xf]
    %v555 = vld [vmem:[%s553 + $0x4] sm:$0xf]
    %v556 = vld [vmem:[%s553 + $0x8] sm:$0xf]
    %v557 = vld [vmem:[%s553 + $0xc] sm:$0xf]
    %v558 = vld [vmem:[%s553 + $0x10] sm:$0xf]
    %v559 = vld [vmem:[%s553 + $0x14] sm:$0xf]
    %v560 = vld [vmem:[%s553 + $0x18] sm:$0xf]
    %v561 = vld [vmem:[%s553 + $0x1c] sm:$0xf]
    %v562 = vld [vmem:[%s553 + $0x20] sm:$0xf]
    %v563 = vld [vmem:[%s553 + $0x24] sm:$0xf]
    %v564 = vld [vmem:[%s553 + $0x28] sm:$0xf]
    %v565 = vld [vmem:[%s553 + $0x2c] sm:$0xf]
    %v566 = vld [vmem:[%s553 + $0x30] sm:$0xf]
    %v567 = vld [vmem:[%s553 + $0x34] sm:$0xf]
    %v568 = vld [vmem:[%s553 + $0x38] sm:$0xf]
    %v569 = vld [vmem:[%s553 + $0x3c] sm:$0xf]
    %v570 = vlaneseq
    %v571 = vshrl.u32 %v570, 7
    %v572 = vsub.s32 3, %v571
    %v573 = vrot.slane %v48, %v572
    %v590 = vunpack.c.l.b16 %v554
    %v591 = vunpack.c.l.b16 %v555
    %v592 = vunpack.c.l.b16 %v556
    %v593 = vunpack.c.l.b16 %v557
    %v594 = vunpack.c.l.b16 %v558
    %v595 = vunpack.c.l.b16 %v559
    %v596 = vunpack.c.l.b16 %v560
    %v597 = vunpack.c.l.b16 %v561
    %v598 = vunpack.c.l.b16 %v562
    %v599 = vunpack.c.l.b16 %v563
    %v600 = vunpack.c.l.b16 %v564
    %v601 = vunpack.c.l.b16 %v565
    %v602 = vunpack.c.l.b16 %v566
    %v603 = vunpack.c.l.b16 %v567
    %v604 = vunpack.c.l.b16 %v568
    %v605 = vunpack.c.l.b16 %v569
    %v606 = vpack.c.b16 %v591, %v590
    %v607 = vpack.c.b16 %v593, %v592
    %v608 = vpack.c.b16 %v595, %v594
    %v609 = vpack.c.b16 %v597, %v596
    %v610 = vpack.c.b16 %v599, %v598
    %v611 = vpack.c.b16 %v601, %v600
    %v612 = vpack.c.b16 %v603, %v602
    %v613 = vpack.c.b16 %v605, %v604
    %622 = vmatprep.subr.bf16.mxu0 0
    %623 = vmatpush1.bf16.msra.mxu0 %v606
    %624 = vmatprep.subr.bf16.mxu0 0
    %625 = vmatpush1.bf16.msra.mxu0 %v607
    %626 = vmatprep.subr.bf16.mxu0 0
    %627 = vmatpush1.bf16.msra.mxu0 %v608
    %628 = vmatprep.subr.bf16.mxu0 0
    %629 = vmatpush1.bf16.msra.mxu0 %v609
    %630 = vmatprep.subr.bf16.mxu0 0
    %631 = vmatpush1.bf16.msra.mxu0 %v610
    %632 = vmatprep.subr.bf16.mxu0 0
    %633 = vmatpush1.bf16.msra.mxu0 %v611
    %634 = vmatprep.subr.bf16.mxu0 0
    %635 = vmatpush1.bf16.msra.mxu0 %v612
    %636 = vmatprep.subr.bf16.mxu0 0
    %637 = vmatpush1.bf16.msra.mxu0 %v613
    %638 = vmatprep.subr.bf16.mxu0 0
    %639 = vmatpush1.bf16.msra.mxu0 0
    %640 = vmatprep.subr.bf16.mxu0 0
    %641 = vmatpush1.bf16.msra.mxu0 0
    %642 = vmatprep.subr.bf16.mxu0 0
    %643 = vmatpush1.bf16.msra.mxu0 0
    %644 = vmatprep.subr.bf16.mxu0 0
    %645 = vmatpush1.bf16.msra.mxu0 0
    %646 = vmatprep.subr.bf16.mxu0 0
    %647 = vmatpush1.bf16.msra.mxu0 0
    %648 = vmatprep.subr.bf16.mxu0 0
    %649 = vmatpush1.bf16.msra.mxu0 0
    %650 = vmatprep.subr.bf16.mxu0 0
    %651 = vmatpush1.bf16.msra.mxu0 0
    %652 = vmatprep.subr.bf16.mxu0 0
    %653 = vmatpush1.bf16.msra.mxu0 0
    %654 = vmatprep.mubr.bf16.mxu0 0
    %655 = vmatmul.mubr.bf16.gmra.mrb[0].mxu0 %v552
    %v656 = vpop.f32.mrb[0].mxu0
    %v657 = vadd.f32 %v573, %v656
    %v658 = vpop.f32.mrb[0].mxu0
    %v659 = vpop.f32.mrb[0].mxu0
    %v660 = vadd.f32 %v573, %v659
    %v661 = vpop.f32.mrb[0].mxu0
    %662 = vdwg.mxu0
    %v663 = vadd.f32 %v657, %v391
    %v664 = vadd.f32 %v660, %v394
    %v665 = vpack.c.bf16 %v664, %v663
    %s666 = scalar_lea.vmem [#allocation4], 192
    %v667 = vld [vmem:[%s666] sm:$0xf]
    %v668 = vld [vmem:[%s666 + $0x4] sm:$0xf]
    %v669 = vld [vmem:[%s666 + $0x8] sm:$0xf]
    %v670 = vld [vmem:[%s666 + $0xc] sm:$0xf]
    %v671 = vld [vmem:[%s666 + $0x10] sm:$0xf]
    %v672 = vld [vmem:[%s666 + $0x14] sm:$0xf]
    %v673 = vld [vmem:[%s666 + $0x18] sm:$0xf]
    %v674 = vld [vmem:[%s666 + $0x1c] sm:$0xf]
    %v675 = vld [vmem:[%s666 + $0x20] sm:$0xf]
    %v676 = vld [vmem:[%s666 + $0x24] sm:$0xf]
    %v677 = vld [vmem:[%s666 + $0x28] sm:$0xf]
    %v678 = vld [vmem:[%s666 + $0x2c] sm:$0xf]
    %v679 = vld [vmem:[%s666 + $0x30] sm:$0xf]
    %v680 = vld [vmem:[%s666 + $0x34] sm:$0xf]
    %v681 = vld [vmem:[%s666 + $0x38] sm:$0xf]
    %v682 = vld [vmem:[%s666 + $0x3c] sm:$0xf]
    %v699 = vunpack.c.l.b16 %v667
    %v700 = vunpack.c.l.b16 %v668
    %v701 = vunpack.c.l.b16 %v669
    %v702 = vunpack.c.l.b16 %v670
    %v703 = vunpack.c.l.b16 %v671
    %v704 = vunpack.c.l.b16 %v672
    %v705 = vunpack.c.l.b16 %v673
    %v706 = vunpack.c.l.b16 %v674
    %v707 = vunpack.c.l.b16 %v675
    %v708 = vunpack.c.l.b16 %v676
    %v709 = vunpack.c.l.b16 %v677
    %v710 = vunpack.c.l.b16 %v678
    %v711 = vunpack.c.l.b16 %v679
    %v712 = vunpack.c.l.b16 %v680
    %v713 = vunpack.c.l.b16 %v681
    %v714 = vunpack.c.l.b16 %v682
    %v715 = vpack.c.b16 %v700, %v699
    %v716 = vpack.c.b16 %v702, %v701
    %v717 = vpack.c.b16 %v704, %v703
    %v718 = vpack.c.b16 %v706, %v705
    %v719 = vpack.c.b16 %v708, %v707
    %v720 = vpack.c.b16 %v710, %v709
    %v721 = vpack.c.b16 %v712, %v711
    %v722 = vpack.c.b16 %v714, %v713
    %731 = vmatprep.subr.bf16.mxu0 0
    %732 = vmatpush1.bf16.msra.mxu0 %v715
    %733 = vmatprep.subr.bf16.mxu0 0
    %734 = vmatpush1.bf16.msra.mxu0 %v716
    %735 = vmatprep.subr.bf16.mxu0 0
    %736 = vmatpush1.bf16.msra.mxu0 %v717
    %737 = vmatprep.subr.bf16.mxu0 0
    %738 = vmatpush1.bf16.msra.mxu0 %v718
    %739 = vmatprep.subr.bf16.mxu0 0
    %740 = vmatpush1.bf16.msra.mxu0 %v719
    %741 = vmatprep.subr.bf16.mxu0 0
    %742 = vmatpush1.bf16.msra.mxu0 %v720
    %743 = vmatprep.subr.bf16.mxu0 0
    %744 = vmatpush1.bf16.msra.mxu0 %v721
    %745 = vmatprep.subr.bf16.mxu0 0
    %746 = vmatpush1.bf16.msra.mxu0 %v722
    %747 = vmatprep.subr.bf16.mxu0 0
    %748 = vmatpush1.bf16.msra.mxu0 0
    %749 = vmatprep.subr.bf16.mxu0 0
    %750 = vmatpush1.bf16.msra.mxu0 0
    %751 = vmatprep.subr.bf16.mxu0 0
    %752 = vmatpush1.bf16.msra.mxu0 0
    %753 = vmatprep.subr.bf16.mxu0 0
    %754 = vmatpush1.bf16.msra.mxu0 0
    %755 = vmatprep.subr.bf16.mxu0 0
    %756 = vmatpush1.bf16.msra.mxu0 0
    %757 = vmatprep.subr.bf16.mxu0 0
    %758 = vmatpush1.bf16.msra.mxu0 0
    %759 = vmatprep.subr.bf16.mxu0 0
    %760 = vmatpush1.bf16.msra.mxu0 0
    %761 = vmatprep.subr.bf16.mxu0 0
    %762 = vmatpush1.bf16.msra.mxu0 0
    %763 = vmatprep.mubr.bf16.mxu0 0
    %764 = vmatmul.mubr.bf16.gmra.mrb[0].mxu0 %v665
    %v765 = vpop.f32.mrb[0].mxu0
    %v766 = vadd.f32 0.0, %v765
    %v767 = vpop.f32.mrb[0].mxu0
    %v768 = vpop.f32.mrb[0].mxu0
    %v769 = vadd.f32 0.0, %v768
    %v770 = vpop.f32.mrb[0].mxu0
    %771 = vdwg.mxu0
    %v772 = vadd.f32 %v233, %v766
    %v773 = vadd.f32 %v237, %v769
    %v774 = vlaneseq
    %v775 = vshrl.u32 %v774, 7
    %v776 = vsub.s32 4, %v775
    %v777 = vrot.slane %v48, %v776
    %v778 = vadd.f32 %v772, %v777
    %v779 = vadd.f32 %v773, %v777
    %vm780 = vcmp.gt.f32.partialorder %v778, 0.0
    %vm781 = vcmp.gt.f32.partialorder %v779, 0.0
    %v782 = vmin.f32 %v778, 0.0
    %v783 = vmin.f32 %v779, 0.0
    %v784 = vmul.f32 %v782, 1.442695
    %v785 = vpow.pop %v784
    %v786 = vmul.f32 %v783, 1.442695
    %v787 = vpow.pop %v786
    %v788 = vsub.f32 %v785, 1.0
    %v789 = vsub.f32 %v787, 1.0
    %v790 = vsel %vm780, %v778, %v788
    %v791 = vsel %vm781, %v779, %v789
    %792 = vadd.xlane.f32.xlu0 %v790
    %v793 = vpop.xlane.xlu0 %792
    %794 = vadd.xlane.f32.xlu0 %v791
    %v795 = vpop.xlane.xlu0 %794
    %v796 = vmul.f32 %v793, 0.0078125
    %v797 = vmul.f32 %v795, 0.0078125
    %v798 = vmul.f32 %v790, %v790
    %v799 = vmul.f32 %v791, %v791
    %800 = vadd.xlane.f32.xlu0 %v798
    %v801 = vpop.xlane.xlu0 %800
    %802 = vadd.xlane.f32.xlu0 %v799
    %v803 = vpop.xlane.xlu0 %802
    %v804 = vmul.f32 %v801, 0.0078125
    %v805 = vmul.f32 %v803, 0.0078125
    %v806 = vmul.f32 %v796, %v796
    %v807 = vmul.f32 %v797, %v797
    %v808 = vsub.f32 %v804, %v806
    %v809 = vsub.f32 %v805, %v807
    %v810 = vmax.f32 %v808, 0.0
    %v811 = vmax.f32 %v809, 0.0
    %v812 = vsub.f32 %v790, %v796
    %v813 = vsub.f32 %v791, %v797
    %v814 = vadd.f32 %v810, 1e-05
    %v815 = vadd.f32 %v811, 1e-05
    %v816 = vrsqrt.pop %v814
    %v817 = vrsqrt.pop %v815
    %v818 = vmul.f32 %v812, %v816
    %v819 = vmul.f32 %v813, %v817
    %v820 = vpack.c.bf16 %v819, %v818
    %s821 = scalar_lea.vmem [#allocation4], 256
    %v822 = vld [vmem:[%s821] sm:$0xf]
    %v823 = vld [vmem:[%s821 + $0x4] sm:$0xf]
    %v824 = vld [vmem:[%s821 + $0x8] sm:$0xf]
    %v825 = vld [vmem:[%s821 + $0xc] sm:$0xf]
    %v826 = vld [vmem:[%s821 + $0x10] sm:$0xf]
    %v827 = vld [vmem:[%s821 + $0x14] sm:$0xf]
    %v828 = vld [vmem:[%s821 + $0x18] sm:$0xf]
    %v829 = vld [vmem:[%s821 + $0x1c] sm:$0xf]
    %v830 = vld [vmem:[%s821 + $0x20] sm:$0xf]
    %v831 = vld [vmem:[%s821 + $0x24] sm:$0xf]
    %v832 = vld [vmem:[%s821 + $0x28] sm:$0xf]
    %v833 = vld [vmem:[%s821 + $0x2c] sm:$0xf]
    %v834 = vld [vmem:[%s821 + $0x30] sm:$0xf]
    %v835 = vld [vmem:[%s821 + $0x34] sm:$0xf]
    %v836 = vld [vmem:[%s821 + $0x38] sm:$0xf]
    %v837 = vld [vmem:[%s821 + $0x3c] sm:$0xf]
    %v838 = vlaneseq
    %v839 = vshrl.u32 %v838, 7
    %v840 = vsub.s32 5, %v839
    %v841 = vrot.slane %v48, %v840
    %v858 = vunpack.c.l.b16 %v822
    %v859 = vunpack.c.l.b16 %v823
    %v860 = vunpack.c.l.b16 %v824
    %v861 = vunpack.c.l.b16 %v825
    %v862 = vunpack.c.l.b16 %v826
    %v863 = vunpack.c.l.b16 %v827
    %v864 = vunpack.c.l.b16 %v828
    %v865 = vunpack.c.l.b16 %v829
    %v866 = vunpack.c.l.b16 %v830
    %v867 = vunpack.c.l.b16 %v831
    %v868 = vunpack.c.l.b16 %v832
    %v869 = vunpack.c.l.b16 %v833
    %v870 = vunpack.c.l.b16 %v834
    %v871 = vunpack.c.l.b16 %v835
    %v872 = vunpack.c.l.b16 %v836
    %v873 = vunpack.c.l.b16 %v837
    %v874 = vpack.c.b16 %v859, %v858
    %v875 = vpack.c.b16 %v861, %v860
    %v876 = vpack.c.b16 %v863, %v862
    %v877 = vpack.c.b16 %v865, %v864
    %v878 = vpack.c.b16 %v867, %v866
    %v879 = vpack.c.b16 %v869, %v868
    %v880 = vpack.c.b16 %v871, %v870
    %v881 = vpack.c.b16 %v873, %v872
    %890 = vmatprep.subr.bf16.mxu0 0
    %891 = vmatpush1.bf16.msra.mxu0 %v874
    %892 = vmatprep.subr.bf16.mxu0 0
    %893 = vmatpush1.bf16.msra.mxu0 %v875
    %894 = vmatprep.subr.bf16.mxu0 0
    %895 = vmatpush1.bf16.msra.mxu0 %v876
    %896 = vmatprep.subr.bf16.mxu0 0
    %897 = vmatpush1.bf16.msra.mxu0 %v877
    %898 = vmatprep.subr.bf16.mxu0 0
    %899 = vmatpush1.bf16.msra.mxu0 %v878
    %900 = vmatprep.subr.bf16.mxu0 0
    %901 = vmatpush1.bf16.msra.mxu0 %v879
    %902 = vmatprep.subr.bf16.mxu0 0
    %903 = vmatpush1.bf16.msra.mxu0 %v880
    %904 = vmatprep.subr.bf16.mxu0 0
    %905 = vmatpush1.bf16.msra.mxu0 %v881
    %906 = vmatprep.subr.bf16.mxu0 0
    %907 = vmatpush1.bf16.msra.mxu0 0
    %908 = vmatprep.subr.bf16.mxu0 0
    %909 = vmatpush1.bf16.msra.mxu0 0
    %910 = vmatprep.subr.bf16.mxu0 0
    %911 = vmatpush1.bf16.msra.mxu0 0
    %912 = vmatprep.subr.bf16.mxu0 0
    %913 = vmatpush1.bf16.msra.mxu0 0
    %914 = vmatprep.subr.bf16.mxu0 0
    %915 = vmatpush1.bf16.msra.mxu0 0
    %916 = vmatprep.subr.bf16.mxu0 0
    %917 = vmatpush1.bf16.msra.mxu0 0
    %918 = vmatprep.subr.bf16.mxu0 0
    %919 = vmatpush1.bf16.msra.mxu0 0
    %920 = vmatprep.subr.bf16.mxu0 0
    %921 = vmatpush1.bf16.msra.mxu0 0
    %922 = vmatprep.mubr.bf16.mxu0 0
    %923 = vmatmul.mubr.bf16.gmra.mrb[0].mxu0 %v820
    %v924 = vpop.f32.mrb[0].mxu0
    %v925 = vadd.f32 %v841, %v924
    %v926 = vpop.f32.mrb[0].mxu0
    %v927 = vpop.f32.mrb[0].mxu0
    %v928 = vadd.f32 %v841, %v927
    %v929 = vpop.f32.mrb[0].mxu0
    %930 = vdwg.mxu0
    %v931 = vadd.f32 %v925, %v663
    %v932 = vadd.f32 %v928, %v664
    %v933 = vpack.c.bf16 %v932, %v931
    %s934 = scalar_lea.vmem [#allocation4], 320
    %v935 = vld [vmem:[%s934] sm:$0xf]
    %v936 = vld [vmem:[%s934 + $0x4] sm:$0xf]
    %v937 = vld [vmem:[%s934 + $0x8] sm:$0xf]
    %v938 = vld [vmem:[%s934 + $0xc] sm:$0xf]
    %v939 = vld [vmem:[%s934 + $0x10] sm:$0xf]
    %v940 = vld [vmem:[%s934 + $0x14] sm:$0xf]
    %v941 = vld [vmem:[%s934 + $0x18] sm:$0xf]
    %v942 = vld [vmem:[%s934 + $0x1c] sm:$0xf]
    %v943 = vld [vmem:[%s934 + $0x20] sm:$0xf]
    %v944 = vld [vmem:[%s934 + $0x24] sm:$0xf]
    %v945 = vld [vmem:[%s934 + $0x28] sm:$0xf]
    %v946 = vld [vmem:[%s934 + $0x2c] sm:$0xf]
    %v947 = vld [vmem:[%s934 + $0x30] sm:$0xf]
    %v948 = vld [vmem:[%s934 + $0x34] sm:$0xf]
    %v949 = vld [vmem:[%s934 + $0x38] sm:$0xf]
    %v950 = vld [vmem:[%s934 + $0x3c] sm:$0xf]
    %v967 = vunpack.c.l.b16 %v935
    %v968 = vunpack.c.l.b16 %v936
    %v969 = vunpack.c.l.b16 %v937
    %v970 = vunpack.c.l.b16 %v938
    %v971 = vunpack.c.l.b16 %v939
    %v972 = vunpack.c.l.b16 %v940
    %v973 = vunpack.c.l.b16 %v941
    %v974 = vunpack.c.l.b16 %v942
    %v975 = vunpack.c.l.b16 %v943
    %v976 = vunpack.c.l.b16 %v944
    %v977 = vunpack.c.l.b16 %v945
    %v978 = vunpack.c.l.b16 %v946
    %v979 = vunpack.c.l.b16 %v947
    %v980 = vunpack.c.l.b16 %v948
    %v981 = vunpack.c.l.b16 %v949
    %v982 = vunpack.c.l.b16 %v950
    %v983 = vpack.c.b16 %v968, %v967
    %v984 = vpack.c.b16 %v970, %v969
    %v985 = vpack.c.b16 %v972, %v971
    %v986 = vpack.c.b16 %v974, %v973
    %v987 = vpack.c.b16 %v976, %v975
    %v988 = vpack.c.b16 %v978, %v977
    %v989 = vpack.c.b16 %v980, %v979
    %v990 = vpack.c.b16 %v982, %v981
    %999 = vmatprep.subr.bf16.mxu0 0
    %1000 = vmatpush1.bf16.msra.mxu0 %v983
    %1001 = vmatprep.subr.bf16.mxu0 0
    %1002 = vmatpush1.bf16.msra.mxu0 %v984
    %1003 = vmatprep.subr.bf16.mxu0 0
    %1004 = vmatpush1.bf16.msra.mxu0 %v985
    %1005 = vmatprep.subr.bf16.mxu0 0
    %1006 = vmatpush1.bf16.msra.mxu0 %v986
    %1007 = vmatprep.subr.bf16.mxu0 0
    %1008 = vmatpush1.bf16.msra.mxu0 %v987
    %1009 = vmatprep.subr.bf16.mxu0 0
    %1010 = vmatpush1.bf16.msra.mxu0 %v988
    %1011 = vmatprep.subr.bf16.mxu0 0
    %1012 = vmatpush1.bf16.msra.mxu0 %v989
    %1013 = vmatprep.subr.bf16.mxu0 0
    %1014 = vmatpush1.bf16.msra.mxu0 %v990
    %1015 = vmatprep.subr.bf16.mxu0 0
    %1016 = vmatpush1.bf16.msra.mxu0 0
    %1017 = vmatprep.subr.bf16.mxu0 0
    %1018 = vmatpush1.bf16.msra.mxu0 0
    %1019 = vmatprep.subr.bf16.mxu0 0
    %1020 = vmatpush1.bf16.msra.mxu0 0
    %1021 = vmatprep.subr.bf16.mxu0 0
    %1022 = vmatpush1.bf16.msra.mxu0 0
    %1023 = vmatprep.subr.bf16.mxu0 0
    %1024 = vmatpush1.bf16.msra.mxu0 0
    %1025 = vmatprep.subr.bf16.mxu0 0
    %1026 = vmatpush1.bf16.msra.mxu0 0
    %1027 = vmatprep.subr.bf16.mxu0 0
    %1028 = vmatpush1.bf16.msra.mxu0 0
    %1029 = vmatprep.subr.bf16.mxu0 0
    %1030 = vmatpush1.bf16.msra.mxu0 0
    %1031 = vmatprep.mubr.bf16.mxu0 0
    %1032 = vmatmul.mubr.bf16.gmra.mrb[0].mxu0 %v933
    %v1033 = vpop.f32.mrb[0].mxu0
    %v1034 = vadd.f32 0.0, %v1033
    %v1035 = vpop.f32.mrb[0].mxu0
    %v1036 = vpop.f32.mrb[0].mxu0
    %v1037 = vadd.f32 0.0, %v1036
    %v1038 = vpop.f32.mrb[0].mxu0
    %1039 = vdwg.mxu0
    %v1040 = vadd.f32 %v235, %v1034
    %v1041 = vadd.f32 %v239, %v1037
    %v1042 = vlaneseq
    %v1043 = vshrl.u32 %v1042, 7
    %v1044 = vsub.s32 6, %v1043
    %v1045 = vrot.slane %v48, %v1044
    %v1046 = vadd.f32 %v1040, %v1045
    %v1047 = vadd.f32 %v1041, %v1045
    %vm1048 = vcmp.gt.f32.partialorder %v1046, 0.0
    %vm1049 = vcmp.gt.f32.partialorder %v1047, 0.0
    %v1050 = vmin.f32 %v1046, 0.0
    %v1051 = vmin.f32 %v1047, 0.0
    %v1052 = vmul.f32 %v1050, 1.442695
    %v1053 = vpow.pop %v1052
    %v1054 = vmul.f32 %v1051, 1.442695
    %v1055 = vpow.pop %v1054
    %v1056 = vsub.f32 %v1053, 1.0
    %v1057 = vsub.f32 %v1055, 1.0
    %v1058 = vsel %vm1048, %v1046, %v1056
    %v1059 = vsel %vm1049, %v1047, %v1057
    %1060 = vadd.xlane.f32.xlu0 %v1058
    %v1061 = vpop.xlane.xlu0 %1060
    %1062 = vadd.xlane.f32.xlu0 %v1059
    %v1063 = vpop.xlane.xlu0 %1062
    %v1064 = vmul.f32 %v1061, 0.0078125
    %v1065 = vmul.f32 %v1063, 0.0078125
    %v1066 = vmul.f32 %v1058, %v1058
    %v1067 = vmul.f32 %v1059, %v1059
    %1068 = vadd.xlane.f32.xlu0 %v1066
    %v1069 = vpop.xlane.xlu0 %1068
    %1070 = vadd.xlane.f32.xlu0 %v1067
    %v1071 = vpop.xlane.xlu0 %1070
    %v1072 = vmul.f32 %v1069, 0.0078125
    %v1073 = vmul.f32 %v1071, 0.0078125
    %v1074 = vmul.f32 %v1064, %v1064
    %v1075 = vmul.f32 %v1065, %v1065
    %v1076 = vsub.f32 %v1072, %v1074
    %v1077 = vsub.f32 %v1073, %v1075
    %v1078 = vmax.f32 %v1076, 0.0
    %v1079 = vmax.f32 %v1077, 0.0
    %v1080 = vsub.f32 %v1058, %v1064
    %v1081 = vsub.f32 %v1059, %v1065
    %v1082 = vadd.f32 %v1078, 1e-05
    %v1083 = vadd.f32 %v1079, 1e-05
    %v1084 = vrsqrt.pop %v1082
    %v1085 = vrsqrt.pop %v1083
    %v1086 = vmul.f32 %v1080, %v1084
    %v1087 = vmul.f32 %v1081, %v1085
    %v1088 = vpack.c.bf16 %v1087, %v1086
    %s1089 = scalar_lea.vmem [#allocation4], 384
    %v1090 = vld [vmem:[%s1089] sm:$0xf]
    %v1091 = vld [vmem:[%s1089 + $0x4] sm:$0xf]
    %v1092 = vld [vmem:[%s1089 + $0x8] sm:$0xf]
    %v1093 = vld [vmem:[%s1089 + $0xc] sm:$0xf]
    %v1094 = vld [vmem:[%s1089 + $0x10] sm:$0xf]
    %v1095 = vld [vmem:[%s1089 + $0x14] sm:$0xf]
    %v1096 = vld [vmem:[%s1089 + $0x18] sm:$0xf]
    %v1097 = vld [vmem:[%s1089 + $0x1c] sm:$0xf]
    %v1098 = vld [vmem:[%s1089 + $0x20] sm:$0xf]
    %v1099 = vld [vmem:[%s1089 + $0x24] sm:$0xf]
    %v1100 = vld [vmem:[%s1089 + $0x28] sm:$0xf]
    %v1101 = vld [vmem:[%s1089 + $0x2c] sm:$0xf]
    %v1102 = vld [vmem:[%s1089 + $0x30] sm:$0xf]
    %v1103 = vld [vmem:[%s1089 + $0x34] sm:$0xf]
    %v1104 = vld [vmem:[%s1089 + $0x38] sm:$0xf]
    %v1105 = vld [vmem:[%s1089 + $0x3c] sm:$0xf]
    %v1106 = vlaneseq
    %v1107 = vshrl.u32 %v1106, 7
    %v1108 = vsub.s32 7, %v1107
    %v1109 = vrot.slane %v48, %v1108
    %v1126 = vunpack.c.l.b16 %v1090
    %v1127 = vunpack.c.l.b16 %v1091
    %v1128 = vunpack.c.l.b16 %v1092
    %v1129 = vunpack.c.l.b16 %v1093
    %v1130 = vunpack.c.l.b16 %v1094
    %v1131 = vunpack.c.l.b16 %v1095
    %v1132 = vunpack.c.l.b16 %v1096
    %v1133 = vunpack.c.l.b16 %v1097
    %v1134 = vunpack.c.l.b16 %v1098
    %v1135 = vunpack.c.l.b16 %v1099
    %v1136 = vunpack.c.l.b16 %v1100
    %v1137 = vunpack.c.l.b16 %v1101
    %v1138 = vunpack.c.l.b16 %v1102
    %v1139 = vunpack.c.l.b16 %v1103
    %v1140 = vunpack.c.l.b16 %v1104
    %v1141 = vunpack.c.l.b16 %v1105
    %v1142 = vpack.c.b16 %v1127, %v1126
    %v1143 = vpack.c.b16 %v1129, %v1128
    %v1144 = vpack.c.b16 %v1131, %v1130
    %v1145 = vpack.c.b16 %v1133, %v1132
    %v1146 = vpack.c.b16 %v1135, %v1134
    %v1147 = vpack.c.b16 %v1137, %v1136
    %v1148 = vpack.c.b16 %v1139, %v1138
    %v1149 = vpack.c.b16 %v1141, %v1140
    %1158 = vmatprep.subr.bf16.mxu0 0
    %1159 = vmatpush1.bf16.msra.mxu0 %v1142
    %1160 = vmatprep.subr.bf16.mxu0 0
    %1161 = vmatpush1.bf16.msra.mxu0 %v1143
    %1162 = vmatprep.subr.bf16.mxu0 0
    %1163 = vmatpush1.bf16.msra.mxu0 %v1144
    %1164 = vmatprep.subr.bf16.mxu0 0
    %1165 = vmatpush1.bf16.msra.mxu0 %v1145
    %1166 = vmatprep.subr.bf16.mxu0 0
    %1167 = vmatpush1.bf16.msra.mxu0 %v1146
    %1168 = vmatprep.subr.bf16.mxu0 0
    %1169 = vmatpush1.bf16.msra.mxu0 %v1147
    %1170 = vmatprep.subr.bf16.mxu0 0
    %1171 = vmatpush1.bf16.msra.mxu0 %v1148
    %1172 = vmatprep.subr.bf16.mxu0 0
    %1173 = vmatpush1.bf16.msra.mxu0 %v1149
    %1174 = vmatprep.subr.bf16.mxu0 0
    %1175 = vmatpush1.bf16.msra.mxu0 0
    %1176 = vmatprep.subr.bf16.mxu0 0
    %1177 = vmatpush1.bf16.msra.mxu0 0
    %1178 = vmatprep.subr.bf16.mxu0 0
    %1179 = vmatpush1.bf16.msra.mxu0 0
    %1180 = vmatprep.subr.bf16.mxu0 0
    %1181 = vmatpush1.bf16.msra.mxu0 0
    %1182 = vmatprep.subr.bf16.mxu0 0
    %1183 = vmatpush1.bf16.msra.mxu0 0
    %1184 = vmatprep.subr.bf16.mxu0 0
    %1185 = vmatpush1.bf16.msra.mxu0 0
    %1186 = vmatprep.subr.bf16.mxu0 0
    %1187 = vmatpush1.bf16.msra.mxu0 0
    %1188 = vmatprep.subr.bf16.mxu0 0
    %1189 = vmatpush1.bf16.msra.mxu0 0
    %1190 = vmatprep.mubr.bf16.mxu0 0
    %1191 = vmatmul.mubr.bf16.gmra.mrb[0].mxu0 %v1088
    %v1192 = vpop.f32.mrb[0].mxu0
    %v1193 = vadd.f32 %v1109, %v1192
    %v1194 = vpop.f32.mrb[0].mxu0
    %v1195 = vpop.f32.mrb[0].mxu0
    %v1196 = vadd.f32 %v1109, %v1195
    %v1197 = vpop.f32.mrb[0].mxu0
    %1198 = vdwg.mxu0
    %v1199 = vadd.f32 %v1193, %v931
    %v1200 = vadd.f32 %v1196, %v932
    %v1201 = vpack.c.bf16 %v1200, %v1199
    %s1202 = scalar_lea.vmem [#allocation4], 448
    %v1203 = vld [vmem:[%s1202] sm:$0xf]
    %v1204 = vld [vmem:[%s1202 + $0x4] sm:$0xf]
    %v1205 = vld [vmem:[%s1202 + $0x8] sm:$0xf]
    %v1206 = vld [vmem:[%s1202 + $0xc] sm:$0xf]
    %v1207 = vld [vmem:[%s1202 + $0x10] sm:$0xf]
    %v1208 = vld [vmem:[%s1202 + $0x14] sm:$0xf]
    %v1209 = vld [vmem:[%s1202 + $0x18] sm:$0xf]
    %v1210 = vld [vmem:[%s1202 + $0x1c] sm:$0xf]
    %v1211 = vld [vmem:[%s1202 + $0x20] sm:$0xf]
    %v1212 = vld [vmem:[%s1202 + $0x24] sm:$0xf]
    %v1213 = vld [vmem:[%s1202 + $0x28] sm:$0xf]
    %v1214 = vld [vmem:[%s1202 + $0x2c] sm:$0xf]
    %v1215 = vld [vmem:[%s1202 + $0x30] sm:$0xf]
    %v1216 = vld [vmem:[%s1202 + $0x34] sm:$0xf]
    %v1217 = vld [vmem:[%s1202 + $0x38] sm:$0xf]
    %v1218 = vld [vmem:[%s1202 + $0x3c] sm:$0xf]
    %v1219 = vlaneseq
    %v1220 = vshrl.u32 %v1219, 7
    %v1221 = vsub.s32 0, %v1220
    %v1222 = vrot.slane %v49, %v1221
    %v1239 = vunpack.c.l.b16 %v1203
    %v1240 = vunpack.c.l.b16 %v1204
    %v1241 = vunpack.c.l.b16 %v1205
    %v1242 = vunpack.c.l.b16 %v1206
    %v1243 = vunpack.c.l.b16 %v1207
    %v1244 = vunpack.c.l.b16 %v1208
    %v1245 = vunpack.c.l.b16 %v1209
    %v1246 = vunpack.c.l.b16 %v1210
    %v1247 = vunpack.c.l.b16 %v1211
    %v1248 = vunpack.c.l.b16 %v1212
    %v1249 = vunpack.c.l.b16 %v1213
    %v1250 = vunpack.c.l.b16 %v1214
    %v1251 = vunpack.c.l.b16 %v1215
    %v1252 = vunpack.c.l.b16 %v1216
    %v1253 = vunpack.c.l.b16 %v1217
    %v1254 = vunpack.c.l.b16 %v1218
    %v1255 = vpack.c.b16 %v1240, %v1239
    %v1256 = vpack.c.b16 %v1242, %v1241
    %v1257 = vpack.c.b16 %v1244, %v1243
    %v1258 = vpack.c.b16 %v1246, %v1245
    %v1259 = vpack.c.b16 %v1248, %v1247
    %v1260 = vpack.c.b16 %v1250, %v1249
    %v1261 = vpack.c.b16 %v1252, %v1251
    %v1262 = vpack.c.b16 %v1254, %v1253
    %1271 = vmatprep.subr.bf16.mxu0 0
    %1272 = vmatpush1.bf16.msra.mxu0 %v1255
    %1273 = vmatprep.subr.bf16.mxu0 0
    %1274 = vmatpush1.bf16.msra.mxu0 %v1256
    %1275 = vmatprep.subr.bf16.mxu0 0
    %1276 = vmatpush1.bf16.msra.mxu0 %v1257
    %1277 = vmatprep.subr.bf16.mxu0 0
    %1278 = vmatpush1.bf16.msra.mxu0 %v1258
    %1279 = vmatprep.subr.bf16.mxu0 0
    %1280 = vmatpush1.bf16.msra.mxu0 %v1259
    %1281 = vmatprep.subr.bf16.mxu0 0
    %1282 = vmatpush1.bf16.msra.mxu0 %v1260
    %1283 = vmatprep.subr.bf16.mxu0 0
    %1284 = vmatpush1.bf16.msra.mxu0 %v1261
    %1285 = vmatprep.subr.bf16.mxu0 0
    %1286 = vmatpush1.bf16.msra.mxu0 %v1262
    %1287 = vmatprep.subr.bf16.mxu0 0
    %1288 = vmatpush1.bf16.msra.mxu0 0
    %1289 = vmatprep.subr.bf16.mxu0 0
    %1290 = vmatpush1.bf16.msra.mxu0 0
    %1291 = vmatprep.subr.bf16.mxu0 0
    %1292 = vmatpush1.bf16.msra.mxu0 0
    %1293 = vmatprep.subr.bf16.mxu0 0
    %1294 = vmatpush1.bf16.msra.mxu0 0
    %1295 = vmatprep.subr.bf16.mxu0 0
    %1296 = vmatpush1.bf16.msra.mxu0 0
    %1297 = vmatprep.subr.bf16.mxu0 0
    %1298 = vmatpush1.bf16.msra.mxu0 0
    %1299 = vmatprep.subr.bf16.mxu0 0
    %1300 = vmatpush1.bf16.msra.mxu0 0
    %1301 = vmatprep.subr.bf16.mxu0 0
    %1302 = vmatpush1.bf16.msra.mxu0 0
    %1303 = vmatprep.mubr.bf16.mxu0 0
    %1304 = vmatmul.mubr.bf16.gmra.mrb[0].mxu0 %v1201
    %v1305 = vpop.f32.mrb[0].mxu0
    %v1306 = vadd.f32 %v1222, %v1305
    %v1307 = vpop.f32.mrb[0].mxu0
    %v1308 = vpop.f32.mrb[0].mxu0
    %v1309 = vadd.f32 %v1222, %v1308
    %v1310 = vpop.f32.mrb[0].mxu0
    %1311 = vdwg.mxu0
    %v1312 = vmax.f32 %v1306, 0.0
    %v1313 = vmax.f32 %v1309, 0.0
    %1314 = vadd.xlane.f32.xlu0 %v1312
    %v1315 = vpop.xlane.xlu0 %1314
    %1316 = vadd.xlane.f32.xlu0 %v1313
    %v1317 = vpop.xlane.xlu0 %1316
    %v1318 = vmul.f32 %v1315, 0.03125
    %v1319 = vmul.f32 %v1317, 0.03125
    %v1320 = vmul.f32 %v1312, %v1312
    %v1321 = vmul.f32 %v1313, %v1313
    %1322 = vadd.xlane.f32.xlu0 %v1320
    %v1323 = vpop.xlane.xlu0 %1322
    %1324 = vadd.xlane.f32.xlu0 %v1321
    %v1325 = vpop.xlane.xlu0 %1324
    %v1326 = vmul.f32 %v1323, 0.03125
    %v1327 = vmul.f32 %v1325, 0.03125
    %v1328 = vmul.f32 %v1318, %v1318
    %v1329 = vmul.f32 %v1319, %v1319
    %v1330 = vsub.f32 %v1326, %v1328
    %v1331 = vsub.f32 %v1327, %v1329
    %v1332 = vmax.f32 %v1330, 0.0
    %v1333 = vmax.f32 %v1331, 0.0
    %v1334 = vsub.f32 %v1312, %v1318
    %v1335 = vsub.f32 %v1313, %v1319
    %v1336 = vadd.f32 %v1332, 1e-05
    %v1337 = vadd.f32 %v1333, 1e-05
    %v1338 = vrsqrt.pop %v1336
    %v1339 = vrsqrt.pop %v1337
    %v1340 = vmul.f32 %v1334, %v1338
    %v1341 = vmul.f32 %v1335, %v1339
    %v1342 = vlaneseq
    %v1343 = vshrl.u32 %v1342, 7
    %v1344 = vlaneseq
    %v1345 = vand.u32 %v1344, 127
    %v1346 = vmul.u32 %v1343, 8
    %v1347 = vsub.s32 %v1345, %v1346
    %vm1348 = vcmp.ge.s32.totalorder %v1347, 0
    %vm1349 = vcmp.lt.s32.totalorder %v1347, 8
    %vm1350 = vmand %vm1348, %vm1349
    %v1351 = vsel %vm1350, 0.125, 0.0
    %vm1352 = vcmask 130048
    %v1354 = vsel %vm1352, %v1351, 0
    %1356 = vmatprep.subr.mxu0 0.0
    %1357 = vmatpush1.msra.mxu0 %v1340
    %1358 = vmatprep.subr.mxu0 0.0
    %1359 = vmatpush1.msra.mxu0 %v1341
    %1360 = vmatprep.subr.mxu0 0.0
    %1361 = vmatpush1.msra.mxu0 0.0
    %1362 = vmatprep.subr.mxu0 0.0
    %1363 = vmatpush1.msra.mxu0 0.0
    %1364 = vmatprep.subr.mxu0 0.0
    %1365 = vmatpush1.msra.mxu0 0.0
    %1366 = vmatprep.subr.mxu0 0.0
    %1367 = vmatpush1.msra.mxu0 0.0
    %1368 = vmatprep.subr.mxu0 0.0
    %1369 = vmatpush1.msra.mxu0 0.0
    %1370 = vmatprep.subr.mxu0 0.0
    %1371 = vmatpush1.msra.mxu0 0.0
    %1372 = vmatprep.subr.mxu0 0.0
    %1373 = vmatpush1.msra.mxu0 0.0
    %1374 = vmatprep.subr.mxu0 0.0
    %1375 = vmatpush1.msra.mxu0 0.0
    %1376 = vmatprep.subr.mxu0 0.0
    %1377 = vmatpush1.msra.mxu0 0.0
    %1378 = vmatprep.subr.mxu0 0.0
    %1379 = vmatpush1.msra.mxu0 0.0
    %1380 = vmatprep.subr.mxu0 0.0
    %1381 = vmatpush1.msra.mxu0 0.0
    %1382 = vmatprep.subr.mxu0 0.0
    %1383 = vmatpush1.msra.mxu0 0.0
    %1384 = vmatprep.subr.mxu0 0.0
    %1385 = vmatpush1.msra.mxu0 0.0
    %1386 = vmatprep.subr.mxu0 0.0
    %1387 = vmatpush1.msra.mxu0 0.0
    %1388 = vmatprep.subr.mxu0 0.0
    %1389 = vmatpush1.msra.mxu0 0.0
    %1390 = vmatprep.subr.mxu0 0.0
    %1391 = vmatpush1.msra.mxu0 0.0
    %1392 = vmatprep.subr.mxu0 0.0
    %1393 = vmatpush1.msra.mxu0 0.0
    %1394 = vmatprep.subr.mxu0 0.0
    %1395 = vmatpush1.msra.mxu0 0.0
    %1396 = vmatprep.subr.mxu0 0.0
    %1397 = vmatpush1.msra.mxu0 0.0
    %1398 = vmatprep.subr.mxu0 0.0
    %1399 = vmatpush1.msra.mxu0 0.0
    %1400 = vmatprep.subr.mxu0 0.0
    %1401 = vmatpush1.msra.mxu0 0.0
    %1402 = vmatprep.subr.mxu0 0.0
    %1403 = vmatpush1.msra.mxu0 0.0
    %1404 = vmatprep.subr.mxu0 0.0
    %1405 = vmatpush1.msra.mxu0 0.0
    %1406 = vmatprep.subr.mxu0 0.0
    %1407 = vmatpush1.msra.mxu0 0.0
    %1408 = vmatprep.subr.mxu0 0.0
    %1409 = vmatpush1.msra.mxu0 0.0
    %1410 = vmatprep.subr.mxu0 0.0
    %1411 = vmatpush1.msra.mxu0 0.0
    %1412 = vmatprep.subr.mxu0 0.0
    %1413 = vmatpush1.msra.mxu0 0.0
    %1414 = vmatprep.subr.mxu0 0.0
    %1415 = vmatpush1.msra.mxu0 0.0
    %1416 = vmatprep.subr.mxu0 0.0
    %1417 = vmatpush1.msra.mxu0 0.0
    %1418 = vmatprep.subr.mxu0 0.0
    %1419 = vmatpush1.msra.mxu0 0.0
    %1420 = vmatprep.mubr.f32.mxu0 0.0
    %1421 = vmatmul.mubr.f32.gmra.mrb[0].mxu0 %v1354
    %v1422 = vpop.f32.mrb[0].mxu0
    %v1423 = vadd.f32 0.0, %v1422
    %v1424 = vpop.f32.mrb[0].mxu0
    %1425 = vdwg.mxu0
    %v1426 = vlaneseq
    %v1427 = vshrl.u32 %v1426, 7
    %v1428 = vsub.s32 1, %v1427
    %v1429 = vrot.slane %v49, %v1428
    %v1430 = vmul.f32 %v1423, %v1429
    %vm1431 = vcmask 1041408
    %v1432 = vsel %vm1431, %v1430, 0.0
    %1433 = vadd.xlane.f32.xlu0 %v1432
    %v1434 = vpop.xlane.xlu0 %1433
    %v1435 = vlaneseq
    %v1436 = vshrl.u32 %v1435, 7
    %v1437 = vsub.s32 2, %v1436
    %v1438 = vrot.slane %v49, %v1437
    %v1439 = vadd.f32 %v1434, %v1438
    %vm1440 = vcmask 1024
    %1441 = vst.msk [vmem:[%s4] sm:$0x3] %vm1440, %v1439
    // Predicated region
    $region26: #{dsd_pro_forward.1} parent=1 // pred_check
      _
    $region27: #{dsd_pro_forward.1} parent=1 // pred_check_branch
      %1443 = sbr.rel (0) target = $region29
    $region28: #{dsd_pro_forward.1} parent=1 // pred_region
      _
    $region29: #{dsd_pro_forward.1} parent=1 // pred_fallthru
      _
    // Predicated region
    $region30: #{dsd_pro_forward.1} parent=1 // pred_check
      _
    $region31: #{dsd_pro_forward.1} parent=1 // pred_check_branch
      %1445 = sbr.rel (0) target = $region33
    $region32: #{dsd_pro_forward.1} parent=1 // pred_region
      _
    $region33: #{dsd_pro_forward.1} parent=1 // pred_fallthru
      _
    %1446 = vsyncpa [#allocation3], 1
    %1447 = vsyncpa [#allocation5], 1

</llo_original>
